<compile_context>
chip_gen: v5e
topology: v5e:2x2
jax: 0.10.0
libtpu: 0.0.40
codegen_flags: <defaults>
</compile_context>

<pallas_src>
import functools

import jax
import jax.numpy as jnp
from jax.experimental import pallas as pl
from jax.experimental.pallas import tpu as pltpu

_BT = 8  # f32 sublane tile: samples processed per grid step


def _lstm_cell(pre, h, c, w_hh, gate_scale, hidden):
    """One LSTM step for a (BT, ·) batch tile.

    `pre` = x_t @ W_ih + b_ih + b_hh, already computed (constant per step for
    the decoder).  PyTorch gate order (i, f, g, o):
      c' = sigmoid(f)*c + sigmoid(i)*tanh(g);  h' = sigmoid(o)*tanh(c').
    Single tanh over the full (BT, 4H) vreg; sigmoid(x) = 0.5*tanh(x/2)+0.5.
    """
    H = hidden
    gates = pre + jnp.dot(h, w_hh, preferred_element_type=jnp.float32)  # (BT,4H)
    t = jnp.tanh(gates * gate_scale)          # one EUP pass for all 4 gates
    i_g = 0.5 * t[:, 0 * H:1 * H] + 0.5
    f_g = 0.5 * t[:, 1 * H:2 * H] + 0.5
    g_g = t[:, 2 * H:3 * H]
    o_g = 0.5 * t[:, 3 * H:4 * H] + 0.5
    c_new = f_g * c + i_g * g_g
    h_new = o_g * jnp.tanh(c_new)
    return h_new, c_new


def _seq2seq_kernel(x_ref, wih1_ref, b1_ref, whh1_ref, wih2_ref, b2_ref,
                    whh2_ref, y_ref, *, hidden, t_in, t_out, bt):
    """Fused Seq2SeqV2 forward for ONE batch tile of `bt` samples.

    x_ref   : (T_in, bt, D)   time-major raw input tile
    wih1_ref: (D, 4H)    b1_ref : (1, 4H)
    whh1_ref: (H, 4H)
    wih2_ref: (H, 4H)    b2_ref : (1, 4H)
    whh2_ref: (H, 4H)
    y_ref   : (bt, T_out*H)   lane-dense output slab
    """
    H = hidden
    d = x_ref.shape[-1]

    # Lane-constant gate scale: 0.5 on i/f/o lanes, 1.0 on g lanes (hoisted
    # out of the unrolled loops -- JAX does not CSE broadcasts).
    lane = jax.lax.broadcasted_iota(jnp.int32, (1, 4 * H), 1)
    gate_scale = jnp.where((lane >= 2 * H) & (lane < 3 * H), 1.0, 0.5)

    # --- encoder input projection, computed once, off the critical path -----
    # (T_in, bt, D) -> (T_in*bt, D) is layout-preserving (bt == 8 sublanes).
    x2 = x_ref[...].reshape(t_in * bt, d)
    xp = (jnp.dot(x2, wih1_ref[...], preferred_element_type=jnp.float32)
          + b1_ref[...])                          # (T_in*bt, 4H)

    whh1 = whh1_ref[...]
    h = jnp.zeros((bt, H), jnp.float32)
    c = jnp.zeros((bt, H), jnp.float32)

    # --- seq1 recurrence: only h @ W_hh1 on the serial path ------------------
    for t in range(t_in):
        pre = xp[t * bt:(t + 1) * bt, :]          # tile-aligned static slice
        h, c = _lstm_cell(pre, h, c, whh1, gate_scale, H)

    # --- seq2: input is seq1's last output, constant across time -------------
    # so the decoder's input projection is computed exactly once.
    zp = (jnp.dot(h, wih2_ref[...], preferred_element_type=jnp.float32)
          + b2_ref[...])                          # (bt, 4H)
    whh2 = whh2_ref[...]

    ys = []
    for _ in range(t_out):
        h, c = _lstm_cell(zp, h, c, whh2, gate_scale, H)
        ys.append(h)                              # (bt, H)

    # Single lane-dense store of the whole output tile.
    y_ref[...] = jnp.concatenate(ys, axis=1)      # (bt, T_out*H)


def seq2seq_v2_forward(x, params, output_shape):
    """Equivalent of Seq2SeqV2.forward.  x: (B, T_in, D) -> (B, T_out, H)."""
    B, T_in, D = x.shape
    T_out, H = output_shape
    x = x.astype(jnp.float32)

    # Pad batch to a sublane multiple and go time-major; this is a tiny
    # (B*T_in*D*4-byte) wrapper op that lets the kernel compute the whole
    # encoder input projection as one tile-aligned matmul.
    b_pad = pl.cdiv(B, _BT) * _BT
    x_tm = jnp.transpose(x, (1, 0, 2))            # (T_in, B, D)
    if b_pad != B:
        x_tm = jnp.pad(x_tm, ((0, 0), (0, b_pad - B), (0, 0)))
    nb = b_pad // _BT

    kernel = functools.partial(_seq2seq_kernel, hidden=H, t_in=T_in,
                               t_out=T_out, bt=_BT)

    def wspec(shape):
        # Constant index_map -> never re-fetched across grid steps; single-
        # buffer to halve its VMEM footprint (matters once H is scaled up).
        return pl.BlockSpec(shape, lambda i: (0, 0),
                            pipeline_mode=pl.Buffered(1))

    y = pl.pallas_call(
        kernel,
        out_shape=jax.ShapeDtypeStruct((b_pad, T_out * H), jnp.float32),
        grid=(nb,),
        in_specs=[
            pl.BlockSpec((T_in, _BT, D), lambda i: (0, i, 0)),   # x (time-major)
            wspec((D, 4 * H)),                                   # W_ih1
            wspec((1, 4 * H)),                                   # b1
            wspec((H, 4 * H)),                                   # W_hh1
            wspec((H, 4 * H)),                                   # W_ih2
            wspec((1, 4 * H)),                                   # b2
            wspec((H, 4 * H)),                                   # W_hh2
        ],
        out_specs=pl.BlockSpec((_BT, T_out * H), lambda i: (i, 0)),
        compiler_params=pltpu.CompilerParams(
            # Batch-tile axis: for B<=8 this is a single step on one TC; for
            # larger B, v7x's two TensorCores each take whole 8-sample tiles.
            dimension_semantics=("parallel",),
            vmem_limit_bytes=32 * 1024 * 1024,
        ),
    )(x_tm, params["w_ih1"], params["b1"], params["w_hh1"],
      params["w_ih2"], params["b2"], params["w_hh2"])

    # Drop batch padding and restore (B, T_out, H) from the lane-dense slab.
    return y[:B].reshape(B, T_out, H)


# ----------------------- pure-JAX reference (for checking) ------------------
def _lstm_ref(x_tm, h0, c0, w_ih, w_hh, b):
    H = w_hh.shape[0]
    hp = jax.lax.Precision.HIGHEST

    def step(carry, x_t):
        h, c = carry
        gates = (jnp.dot(x_t, w_ih, precision=hp)
                 + jnp.dot(h, w_hh, precision=hp) + b[0])
        i_g = jax.nn.sigmoid(gates[:, :H])
        f_g = jax.nn.sigmoid(gates[:, H:2 * H])
        g_g = jnp.tanh(gates[:, 2 * H:3 * H])
        o_g = jax.nn.sigmoid(gates[:, 3 * H:])
        c = f_g * c + i_g * g_g
        h = o_g * jnp.tanh(c)
        return (h, c), h

    (hN, cN), ys = jax.lax.scan(step, (h0, c0), x_tm)
    return ys, hN, cN


def _seq2seq_ref(x, params, output_shape):
    B, T_in, _ = x.shape
    T_out, H = output_shape
    x_tm = jnp.transpose(x, (1, 0, 2))
    h0 = jnp.zeros((B, H), jnp.float32)
    c0 = jnp.zeros((B, H), jnp.float32)
    y1, hN, cN = _lstm_ref(x_tm, h0, c0,
                           params["w_ih1"], params["w_hh1"], params["b1"])
    z_tm = jnp.broadcast_to(y1[-1][None], (T_out, B, H))
    y2, _, _ = _lstm_ref(z_tm, hN, cN,
                         params["w_ih2"], params["w_hh2"], params["b2"])
    return jnp.transpose(y2, (1, 0, 2))


# ----------------------------- parameter init -------------------------------
def init_params(key, input_size, hidden):
    """Deterministic init mimicking PyTorch's uniform(-1/sqrt(H), 1/sqrt(H)).
    Weights stored pre-transposed: (in_features, 4H); biases combined (1, 4H)."""
    k = 1.0 / jnp.sqrt(jnp.float32(hidden))
    keys = jax.random.split(key, 8)

    def u(kk, shape):
        return jax.random.uniform(kk, shape, jnp.float32, -k, k)

    return {
        "w_ih1": u(keys[0], (input_size, 4 * hidden)),
        "w_hh1": u(keys[1], (hidden, 4 * hidden)),
        "b1":    u(keys[2], (1, 4 * hidden)) + u(keys[3], (1, 4 * hidden)),
        "w_ih2": u(keys[4], (hidden, 4 * hidden)),
        "w_hh2": u(keys[5], (hidden, 4 * hidden)),
        "b2":    u(keys[6], (1, 4 * hidden)) + u(keys[7], (1, 4 * hidden)),
    }


if __name__ == "__main__":
    # Seq2SeqV2(input_shape=(8, 4), output_shape=(6, 32))
    input_shape = (8, 4)     # (T_in, input_size)
    output_shape = (6, 32)   # (T_out, hidden/output_size)
    batch = 2

    key = jax.random.PRNGKey(0)
    k_x, k_p = jax.random.split(key)
    x = jax.random.normal(k_x, (batch, input_shape[0], input_shape[1]),
                          dtype=jnp.float32)
    params = init_params(k_p, input_shape[1], output_shape[1])

    fwd = jax.jit(functools.partial(seq2seq_v2_forward,
                                    output_shape=output_shape))
    y = jax.block_until_ready(fwd(x, params))

    # sanity check against a pure-JAX reference
    y_ref = jax.block_until_ready(_seq2seq_ref(x, params, output_shape))
    assert y.shape == (batch, output_shape[0], output_shape[1])
    assert jnp.allclose(y, y_ref, atol=2e-5, rtol=2e-5), \
        float(jnp.max(jnp.abs(y - y_ref)))

    print("KERNEL_OK")
</pallas_src>

<mosaic_0001>
module attributes {stable_mosaic.version = 11 : i64} {
  func.func @_seq2seq_kernel(%arg0: i32, %arg1: memref<8x8x4xf32, #tpu.memory_space<vmem>>, %arg2: memref<4x128xf32, #tpu.memory_space<vmem>>, %arg3: memref<1x128xf32, #tpu.memory_space<vmem>>, %arg4: memref<32x128xf32, #tpu.memory_space<vmem>>, %arg5: memref<32x128xf32, #tpu.memory_space<vmem>>, %arg6: memref<1x128xf32, #tpu.memory_space<vmem>>, %arg7: memref<32x128xf32, #tpu.memory_space<vmem>>, %arg8: memref<8x192xf32, #tpu.memory_space<vmem>>) attributes {dimension_semantics = [#tpu.dimension_semantics<parallel>], iteration_bounds = array<i64: 1>, scalar_prefetch = 0 : i64, scratch_operands = 0 : i64, tpu.core_type = #tpu.core_type<tc>, window_params = [{transform_indices = @transform_0, window_bounds = array<i64: 8, 8, 4>}, {pipeline_mode = #tpu.pipeline_mode<synchronous>, transform_indices = @transform_1, window_bounds = array<i64: 4, 128>}, {pipeline_mode = #tpu.pipeline_mode<synchronous>, transform_indices = @transform_2, window_bounds = array<i64: 1, 128>}, {pipeline_mode = #tpu.pipeline_mode<synchronous>, transform_indices = @transform_3, window_bounds = array<i64: 32, 128>}, {pipeline_mode = #tpu.pipeline_mode<synchronous>, transform_indices = @transform_4, window_bounds = array<i64: 32, 128>}, {pipeline_mode = #tpu.pipeline_mode<synchronous>, transform_indices = @transform_5, window_bounds = array<i64: 1, 128>}, {pipeline_mode = #tpu.pipeline_mode<synchronous>, transform_indices = @transform_6, window_bounds = array<i64: 32, 128>}, {transform_indices = @transform_7, window_bounds = array<i64: 8, 192>}]} {
    %0 = tpu.iota {dimensions = array<i32: 1>} : vector<1x128xi32>
    %c64_i32 = arith.constant 64 : i32
    %1 = vector.broadcast %c64_i32 : i32 to vector<1x128xi32>
    %2 = arith.cmpi sge, %0, %1 : vector<1x128xi32>
    %c96_i32 = arith.constant 96 : i32
    %3 = vector.broadcast %c96_i32 : i32 to vector<1x128xi32>
    %4 = arith.cmpi slt, %0, %3 : vector<1x128xi32>
    %5 = arith.andi %2, %4 : vector<1x128xi1>
    %cst = arith.constant 1.000000e+00 : f32
    %cst_0 = arith.constant 5.000000e-01 : f32
    %6 = vector.broadcast %cst : f32 to vector<1x128xf32>
    %7 = vector.broadcast %cst_0 : f32 to vector<1x128xf32>
    %8 = arith.select %5, %6, %7 : vector<1x128xi1>, vector<1x128xf32>
    %c0 = arith.constant 0 : index
    %c0_1 = arith.constant 0 : index
    %c0_2 = arith.constant 0 : index
    %9 = vector.load %arg1[%c0, %c0_1, %c0_2] : memref<8x8x4xf32, #tpu.memory_space<vmem>>, vector<8x8x4xf32>
    %10 = vector.shape_cast %9 : vector<8x8x4xf32> to vector<64x4xf32>
    %c0_3 = arith.constant 0 : index
    %c0_4 = arith.constant 0 : index
    %11 = vector.load %arg2[%c0_3, %c0_4] : memref<4x128xf32, #tpu.memory_space<vmem>>, vector<4x128xf32>
    %cst_5 = arith.constant dense<0.000000e+00> : vector<64x128xf32>
    %12 = tpu.matmul %10, %11, %cst_5 {dimension_numbers = #tpu.dot_dimension_numbers<[1], [0], [0], [1], [0, 0, 1, 1], [], []>} : vector<64x4xf32>, vector<4x128xf32>, vector<64x128xf32> -> vector<64x128xf32>
    %c0_6 = arith.constant 0 : index
    %c0_7 = arith.constant 0 : index
    %13 = vector.load %arg3[%c0_6, %c0_7] : memref<1x128xf32, #tpu.memory_space<vmem>>, vector<1x128xf32>
    %14 = vector.broadcast %13 : vector<1x128xf32> to vector<64x128xf32>
    %15 = arith.addf %12, %14 : vector<64x128xf32>
    %c0_8 = arith.constant 0 : index
    %c0_9 = arith.constant 0 : index
    %16 = vector.load %arg4[%c0_8, %c0_9] : memref<32x128xf32, #tpu.memory_space<vmem>>, vector<32x128xf32>
    %cst_10 = arith.constant 0.000000e+00 : f32
    %17 = vector.broadcast %cst_10 : f32 to vector<8x32xf32>
    %cst_11 = arith.constant 0.000000e+00 : f32
    %18 = vector.broadcast %cst_11 : f32 to vector<8x32xf32>
    %19 = vector.extract_strided_slice %15 {offsets = [0, 0], sizes = [8, 128], strides = [1, 1]} : vector<64x128xf32> to vector<8x128xf32>
    %cst_12 = arith.constant dense<0.000000e+00> : vector<8x128xf32>
    %20 = tpu.matmul %17, %16, %cst_12 {dimension_numbers = #tpu.dot_dimension_numbers<[1], [0], [0], [1], [0, 0, 1, 1], [], []>} : vector<8x32xf32>, vector<32x128xf32>, vector<8x128xf32> -> vector<8x128xf32>
    %21 = arith.addf %19, %20 : vector<8x128xf32>
    %22 = vector.broadcast %8 : vector<1x128xf32> to vector<8x128xf32>
    %23 = arith.mulf %21, %22 : vector<8x128xf32>
    %24 = math.tanh %23 : vector<8x128xf32>
    %25 = vector.extract_strided_slice %24 {offsets = [0, 0], sizes = [8, 32], strides = [1, 1]} : vector<8x128xf32> to vector<8x32xf32>
    %cst_13 = arith.constant 5.000000e-01 : f32
    %26 = vector.broadcast %cst_13 : f32 to vector<8x32xf32>
    %27 = arith.mulf %26, %25 : vector<8x32xf32>
    %cst_14 = arith.constant 5.000000e-01 : f32
    %28 = vector.broadcast %cst_14 : f32 to vector<8x32xf32>
    %29 = arith.addf %27, %28 : vector<8x32xf32>
    %30 = vector.extract_strided_slice %24 {offsets = [0, 32], sizes = [8, 32], strides = [1, 1]} : vector<8x128xf32> to vector<8x32xf32>
    %cst_15 = arith.constant 5.000000e-01 : f32
    %31 = vector.broadcast %cst_15 : f32 to vector<8x32xf32>
    %32 = arith.mulf %31, %30 : vector<8x32xf32>
    %cst_16 = arith.constant 5.000000e-01 : f32
    %33 = vector.broadcast %cst_16 : f32 to vector<8x32xf32>
    %34 = arith.addf %32, %33 : vector<8x32xf32>
    %35 = vector.extract_strided_slice %24 {offsets = [0, 64], sizes = [8, 32], strides = [1, 1]} : vector<8x128xf32> to vector<8x32xf32>
    %36 = vector.extract_strided_slice %24 {offsets = [0, 96], sizes = [8, 32], strides = [1, 1]} : vector<8x128xf32> to vector<8x32xf32>
    %cst_17 = arith.constant 5.000000e-01 : f32
    %37 = vector.broadcast %cst_17 : f32 to vector<8x32xf32>
    %38 = arith.mulf %37, %36 : vector<8x32xf32>
    %cst_18 = arith.constant 5.000000e-01 : f32
    %39 = vector.broadcast %cst_18 : f32 to vector<8x32xf32>
    %40 = arith.addf %38, %39 : vector<8x32xf32>
    %41 = arith.mulf %34, %18 : vector<8x32xf32>
    %42 = arith.mulf %29, %35 : vector<8x32xf32>
    %43 = arith.addf %41, %42 : vector<8x32xf32>
    %44 = math.tanh %43 : vector<8x32xf32>
    %45 = arith.mulf %40, %44 : vector<8x32xf32>
    %46 = vector.extract_strided_slice %15 {offsets = [8, 0], sizes = [8, 128], strides = [1, 1]} : vector<64x128xf32> to vector<8x128xf32>
    %cst_19 = arith.constant dense<0.000000e+00> : vector<8x128xf32>
    %47 = tpu.matmul %45, %16, %cst_19 {dimension_numbers = #tpu.dot_dimension_numbers<[1], [0], [0], [1], [0, 0, 1, 1], [], []>} : vector<8x32xf32>, vector<32x128xf32>, vector<8x128xf32> -> vector<8x128xf32>
    %48 = arith.addf %46, %47 : vector<8x128xf32>
    %49 = vector.broadcast %8 : vector<1x128xf32> to vector<8x128xf32>
    %50 = arith.mulf %48, %49 : vector<8x128xf32>
    %51 = math.tanh %50 : vector<8x128xf32>
    %52 = vector.extract_strided_slice %51 {offsets = [0, 0], sizes = [8, 32], strides = [1, 1]} : vector<8x128xf32> to vector<8x32xf32>
    %cst_20 = arith.constant 5.000000e-01 : f32
    %53 = vector.broadcast %cst_20 : f32 to vector<8x32xf32>
    %54 = arith.mulf %53, %52 : vector<8x32xf32>
    %cst_21 = arith.constant 5.000000e-01 : f32
    %55 = vector.broadcast %cst_21 : f32 to vector<8x32xf32>
    %56 = arith.addf %54, %55 : vector<8x32xf32>
    %57 = vector.extract_strided_slice %51 {offsets = [0, 32], sizes = [8, 32], strides = [1, 1]} : vector<8x128xf32> to vector<8x32xf32>
    %cst_22 = arith.constant 5.000000e-01 : f32
    %58 = vector.broadcast %cst_22 : f32 to vector<8x32xf32>
    %59 = arith.mulf %58, %57 : vector<8x32xf32>
    %cst_23 = arith.constant 5.000000e-01 : f32
    %60 = vector.broadcast %cst_23 : f32 to vector<8x32xf32>
    %61 = arith.addf %59, %60 : vector<8x32xf32>
    %62 = vector.extract_strided_slice %51 {offsets = [0, 64], sizes = [8, 32], strides = [1, 1]} : vector<8x128xf32> to vector<8x32xf32>
    %63 = vector.extract_strided_slice %51 {offsets = [0, 96], sizes = [8, 32], strides = [1, 1]} : vector<8x128xf32> to vector<8x32xf32>
    %cst_24 = arith.constant 5.000000e-01 : f32
    %64 = vector.broadcast %cst_24 : f32 to vector<8x32xf32>
    %65 = arith.mulf %64, %63 : vector<8x32xf32>
    %cst_25 = arith.constant 5.000000e-01 : f32
    %66 = vector.broadcast %cst_25 : f32 to vector<8x32xf32>
    %67 = arith.addf %65, %66 : vector<8x32xf32>
    %68 = arith.mulf %61, %43 : vector<8x32xf32>
    %69 = arith.mulf %56, %62 : vector<8x32xf32>
    %70 = arith.addf %68, %69 : vector<8x32xf32>
    %71 = math.tanh %70 : vector<8x32xf32>
    %72 = arith.mulf %67, %71 : vector<8x32xf32>
    %73 = vector.extract_strided_slice %15 {offsets = [16, 0], sizes = [8, 128], strides = [1, 1]} : vector<64x128xf32> to vector<8x128xf32>
    %cst_26 = arith.constant dense<0.000000e+00> : vector<8x128xf32>
    %74 = tpu.matmul %72, %16, %cst_26 {dimension_numbers = #tpu.dot_dimension_numbers<[1], [0], [0], [1], [0, 0, 1, 1], [], []>} : vector<8x32xf32>, vector<32x128xf32>, vector<8x128xf32> -> vector<8x128xf32>
    %75 = arith.addf %73, %74 : vector<8x128xf32>
    %76 = vector.broadcast %8 : vector<1x128xf32> to vector<8x128xf32>
    %77 = arith.mulf %75, %76 : vector<8x128xf32>
    %78 = math.tanh %77 : vector<8x128xf32>
    %79 = vector.extract_strided_slice %78 {offsets = [0, 0], sizes = [8, 32], strides = [1, 1]} : vector<8x128xf32> to vector<8x32xf32>
    %cst_27 = arith.constant 5.000000e-01 : f32
    %80 = vector.broadcast %cst_27 : f32 to vector<8x32xf32>
    %81 = arith.mulf %80, %79 : vector<8x32xf32>
    %cst_28 = arith.constant 5.000000e-01 : f32
    %82 = vector.broadcast %cst_28 : f32 to vector<8x32xf32>
    %83 = arith.addf %81, %82 : vector<8x32xf32>
    %84 = vector.extract_strided_slice %78 {offsets = [0, 32], sizes = [8, 32], strides = [1, 1]} : vector<8x128xf32> to vector<8x32xf32>
    %cst_29 = arith.constant 5.000000e-01 : f32
    %85 = vector.broadcast %cst_29 : f32 to vector<8x32xf32>
    %86 = arith.mulf %85, %84 : vector<8x32xf32>
    %cst_30 = arith.constant 5.000000e-01 : f32
    %87 = vector.broadcast %cst_30 : f32 to vector<8x32xf32>
    %88 = arith.addf %86, %87 : vector<8x32xf32>
    %89 = vector.extract_strided_slice %78 {offsets = [0, 64], sizes = [8, 32], strides = [1, 1]} : vector<8x128xf32> to vector<8x32xf32>
    %90 = vector.extract_strided_slice %78 {offsets = [0, 96], sizes = [8, 32], strides = [1, 1]} : vector<8x128xf32> to vector<8x32xf32>
    %cst_31 = arith.constant 5.000000e-01 : f32
    %91 = vector.broadcast %cst_31 : f32 to vector<8x32xf32>
    %92 = arith.mulf %91, %90 : vector<8x32xf32>
    %cst_32 = arith.constant 5.000000e-01 : f32
    %93 = vector.broadcast %cst_32 : f32 to vector<8x32xf32>
    %94 = arith.addf %92, %93 : vector<8x32xf32>
    %95 = arith.mulf %88, %70 : vector<8x32xf32>
    %96 = arith.mulf %83, %89 : vector<8x32xf32>
    %97 = arith.addf %95, %96 : vector<8x32xf32>
    %98 = math.tanh %97 : vector<8x32xf32>
    %99 = arith.mulf %94, %98 : vector<8x32xf32>
    %100 = vector.extract_strided_slice %15 {offsets = [24, 0], sizes = [8, 128], strides = [1, 1]} : vector<64x128xf32> to vector<8x128xf32>
    %cst_33 = arith.constant dense<0.000000e+00> : vector<8x128xf32>
    %101 = tpu.matmul %99, %16, %cst_33 {dimension_numbers = #tpu.dot_dimension_numbers<[1], [0], [0], [1], [0, 0, 1, 1], [], []>} : vector<8x32xf32>, vector<32x128xf32>, vector<8x128xf32> -> vector<8x128xf32>
    %102 = arith.addf %100, %101 : vector<8x128xf32>
    %103 = vector.broadcast %8 : vector<1x128xf32> to vector<8x128xf32>
    %104 = arith.mulf %102, %103 : vector<8x128xf32>
    %105 = math.tanh %104 : vector<8x128xf32>
    %106 = vector.extract_strided_slice %105 {offsets = [0, 0], sizes = [8, 32], strides = [1, 1]} : vector<8x128xf32> to vector<8x32xf32>
    %cst_34 = arith.constant 5.000000e-01 : f32
    %107 = vector.broadcast %cst_34 : f32 to vector<8x32xf32>
    %108 = arith.mulf %107, %106 : vector<8x32xf32>
    %cst_35 = arith.constant 5.000000e-01 : f32
    %109 = vector.broadcast %cst_35 : f32 to vector<8x32xf32>
    %110 = arith.addf %108, %109 : vector<8x32xf32>
    %111 = vector.extract_strided_slice %105 {offsets = [0, 32], sizes = [8, 32], strides = [1, 1]} : vector<8x128xf32> to vector<8x32xf32>
    %cst_36 = arith.constant 5.000000e-01 : f32
    %112 = vector.broadcast %cst_36 : f32 to vector<8x32xf32>
    %113 = arith.mulf %112, %111 : vector<8x32xf32>
    %cst_37 = arith.constant 5.000000e-01 : f32
    %114 = vector.broadcast %cst_37 : f32 to vector<8x32xf32>
    %115 = arith.addf %113, %114 : vector<8x32xf32>
    %116 = vector.extract_strided_slice %105 {offsets = [0, 64], sizes = [8, 32], strides = [1, 1]} : vector<8x128xf32> to vector<8x32xf32>
    %117 = vector.extract_strided_slice %105 {offsets = [0, 96], sizes = [8, 32], strides = [1, 1]} : vector<8x128xf32> to vector<8x32xf32>
    %cst_38 = arith.constant 5.000000e-01 : f32
    %118 = vector.broadcast %cst_38 : f32 to vector<8x32xf32>
    %119 = arith.mulf %118, %117 : vector<8x32xf32>
    %cst_39 = arith.constant 5.000000e-01 : f32
    %120 = vector.broadcast %cst_39 : f32 to vector<8x32xf32>
    %121 = arith.addf %119, %120 : vector<8x32xf32>
    %122 = arith.mulf %115, %97 : vector<8x32xf32>
    %123 = arith.mulf %110, %116 : vector<8x32xf32>
    %124 = arith.addf %122, %123 : vector<8x32xf32>
    %125 = math.tanh %124 : vector<8x32xf32>
    %126 = arith.mulf %121, %125 : vector<8x32xf32>
    %127 = vector.extract_strided_slice %15 {offsets = [32, 0], sizes = [8, 128], strides = [1, 1]} : vector<64x128xf32> to vector<8x128xf32>
    %cst_40 = arith.constant dense<0.000000e+00> : vector<8x128xf32>
    %128 = tpu.matmul %126, %16, %cst_40 {dimension_numbers = #tpu.dot_dimension_numbers<[1], [0], [0], [1], [0, 0, 1, 1], [], []>} : vector<8x32xf32>, vector<32x128xf32>, vector<8x128xf32> -> vector<8x128xf32>
    %129 = arith.addf %127, %128 : vector<8x128xf32>
    %130 = vector.broadcast %8 : vector<1x128xf32> to vector<8x128xf32>
    %131 = arith.mulf %129, %130 : vector<8x128xf32>
    %132 = math.tanh %131 : vector<8x128xf32>
    %133 = vector.extract_strided_slice %132 {offsets = [0, 0], sizes = [8, 32], strides = [1, 1]} : vector<8x128xf32> to vector<8x32xf32>
    %cst_41 = arith.constant 5.000000e-01 : f32
    %134 = vector.broadcast %cst_41 : f32 to vector<8x32xf32>
    %135 = arith.mulf %134, %133 : vector<8x32xf32>
    %cst_42 = arith.constant 5.000000e-01 : f32
    %136 = vector.broadcast %cst_42 : f32 to vector<8x32xf32>
    %137 = arith.addf %135, %136 : vector<8x32xf32>
    %138 = vector.extract_strided_slice %132 {offsets = [0, 32], sizes = [8, 32], strides = [1, 1]} : vector<8x128xf32> to vector<8x32xf32>
    %cst_43 = arith.constant 5.000000e-01 : f32
    %139 = vector.broadcast %cst_43 : f32 to vector<8x32xf32>
    %140 = arith.mulf %139, %138 : vector<8x32xf32>
    %cst_44 = arith.constant 5.000000e-01 : f32
    %141 = vector.broadcast %cst_44 : f32 to vector<8x32xf32>
    %142 = arith.addf %140, %141 : vector<8x32xf32>
    %143 = vector.extract_strided_slice %132 {offsets = [0, 64], sizes = [8, 32], strides = [1, 1]} : vector<8x128xf32> to vector<8x32xf32>
    %144 = vector.extract_strided_slice %132 {offsets = [0, 96], sizes = [8, 32], strides = [1, 1]} : vector<8x128xf32> to vector<8x32xf32>
    %cst_45 = arith.constant 5.000000e-01 : f32
    %145 = vector.broadcast %cst_45 : f32 to vector<8x32xf32>
    %146 = arith.mulf %145, %144 : vector<8x32xf32>
    %cst_46 = arith.constant 5.000000e-01 : f32
    %147 = vector.broadcast %cst_46 : f32 to vector<8x32xf32>
    %148 = arith.addf %146, %147 : vector<8x32xf32>
    %149 = arith.mulf %142, %124 : vector<8x32xf32>
    %150 = arith.mulf %137, %143 : vector<8x32xf32>
    %151 = arith.addf %149, %150 : vector<8x32xf32>
    %152 = math.tanh %151 : vector<8x32xf32>
    %153 = arith.mulf %148, %152 : vector<8x32xf32>
    %154 = vector.extract_strided_slice %15 {offsets = [40, 0], sizes = [8, 128], strides = [1, 1]} : vector<64x128xf32> to vector<8x128xf32>
    %cst_47 = arith.constant dense<0.000000e+00> : vector<8x128xf32>
    %155 = tpu.matmul %153, %16, %cst_47 {dimension_numbers = #tpu.dot_dimension_numbers<[1], [0], [0], [1], [0, 0, 1, 1], [], []>} : vector<8x32xf32>, vector<32x128xf32>, vector<8x128xf32> -> vector<8x128xf32>
    %156 = arith.addf %154, %155 : vector<8x128xf32>
    %157 = vector.broadcast %8 : vector<1x128xf32> to vector<8x128xf32>
    %158 = arith.mulf %156, %157 : vector<8x128xf32>
    %159 = math.tanh %158 : vector<8x128xf32>
    %160 = vector.extract_strided_slice %159 {offsets = [0, 0], sizes = [8, 32], strides = [1, 1]} : vector<8x128xf32> to vector<8x32xf32>
    %cst_48 = arith.constant 5.000000e-01 : f32
    %161 = vector.broadcast %cst_48 : f32 to vector<8x32xf32>
    %162 = arith.mulf %161, %160 : vector<8x32xf32>
    %cst_49 = arith.constant 5.000000e-01 : f32
    %163 = vector.broadcast %cst_49 : f32 to vector<8x32xf32>
    %164 = arith.addf %162, %163 : vector<8x32xf32>
    %165 = vector.extract_strided_slice %159 {offsets = [0, 32], sizes = [8, 32], strides = [1, 1]} : vector<8x128xf32> to vector<8x32xf32>
    %cst_50 = arith.constant 5.000000e-01 : f32
    %166 = vector.broadcast %cst_50 : f32 to vector<8x32xf32>
    %167 = arith.mulf %166, %165 : vector<8x32xf32>
    %cst_51 = arith.constant 5.000000e-01 : f32
    %168 = vector.broadcast %cst_51 : f32 to vector<8x32xf32>
    %169 = arith.addf %167, %168 : vector<8x32xf32>
    %170 = vector.extract_strided_slice %159 {offsets = [0, 64], sizes = [8, 32], strides = [1, 1]} : vector<8x128xf32> to vector<8x32xf32>
    %171 = vector.extract_strided_slice %159 {offsets = [0, 96], sizes = [8, 32], strides = [1, 1]} : vector<8x128xf32> to vector<8x32xf32>
    %cst_52 = arith.constant 5.000000e-01 : f32
    %172 = vector.broadcast %cst_52 : f32 to vector<8x32xf32>
    %173 = arith.mulf %172, %171 : vector<8x32xf32>
    %cst_53 = arith.constant 5.000000e-01 : f32
    %174 = vector.broadcast %cst_53 : f32 to vector<8x32xf32>
    %175 = arith.addf %173, %174 : vector<8x32xf32>
    %176 = arith.mulf %169, %151 : vector<8x32xf32>
    %177 = arith.mulf %164, %170 : vector<8x32xf32>
    %178 = arith.addf %176, %177 : vector<8x32xf32>
    %179 = math.tanh %178 : vector<8x32xf32>
    %180 = arith.mulf %175, %179 : vector<8x32xf32>
    %181 = vector.extract_strided_slice %15 {offsets = [48, 0], sizes = [8, 128], strides = [1, 1]} : vector<64x128xf32> to vector<8x128xf32>
    %cst_54 = arith.constant dense<0.000000e+00> : vector<8x128xf32>
    %182 = tpu.matmul %180, %16, %cst_54 {dimension_numbers = #tpu.dot_dimension_numbers<[1], [0], [0], [1], [0, 0, 1, 1], [], []>} : vector<8x32xf32>, vector<32x128xf32>, vector<8x128xf32> -> vector<8x128xf32>
    %183 = arith.addf %181, %182 : vector<8x128xf32>
    %184 = vector.broadcast %8 : vector<1x128xf32> to vector<8x128xf32>
    %185 = arith.mulf %183, %184 : vector<8x128xf32>
    %186 = math.tanh %185 : vector<8x128xf32>
    %187 = vector.extract_strided_slice %186 {offsets = [0, 0], sizes = [8, 32], strides = [1, 1]} : vector<8x128xf32> to vector<8x32xf32>
    %cst_55 = arith.constant 5.000000e-01 : f32
    %188 = vector.broadcast %cst_55 : f32 to vector<8x32xf32>
    %189 = arith.mulf %188, %187 : vector<8x32xf32>
    %cst_56 = arith.constant 5.000000e-01 : f32
    %190 = vector.broadcast %cst_56 : f32 to vector<8x32xf32>
    %191 = arith.addf %189, %190 : vector<8x32xf32>
    %192 = vector.extract_strided_slice %186 {offsets = [0, 32], sizes = [8, 32], strides = [1, 1]} : vector<8x128xf32> to vector<8x32xf32>
    %cst_57 = arith.constant 5.000000e-01 : f32
    %193 = vector.broadcast %cst_57 : f32 to vector<8x32xf32>
    %194 = arith.mulf %193, %192 : vector<8x32xf32>
    %cst_58 = arith.constant 5.000000e-01 : f32
    %195 = vector.broadcast %cst_58 : f32 to vector<8x32xf32>
    %196 = arith.addf %194, %195 : vector<8x32xf32>
    %197 = vector.extract_strided_slice %186 {offsets = [0, 64], sizes = [8, 32], strides = [1, 1]} : vector<8x128xf32> to vector<8x32xf32>
    %198 = vector.extract_strided_slice %186 {offsets = [0, 96], sizes = [8, 32], strides = [1, 1]} : vector<8x128xf32> to vector<8x32xf32>
    %cst_59 = arith.constant 5.000000e-01 : f32
    %199 = vector.broadcast %cst_59 : f32 to vector<8x32xf32>
    %200 = arith.mulf %199, %198 : vector<8x32xf32>
    %cst_60 = arith.constant 5.000000e-01 : f32
    %201 = vector.broadcast %cst_60 : f32 to vector<8x32xf32>
    %202 = arith.addf %200, %201 : vector<8x32xf32>
    %203 = arith.mulf %196, %178 : vector<8x32xf32>
    %204 = arith.mulf %191, %197 : vector<8x32xf32>
    %205 = arith.addf %203, %204 : vector<8x32xf32>
    %206 = math.tanh %205 : vector<8x32xf32>
    %207 = arith.mulf %202, %206 : vector<8x32xf32>
    %208 = vector.extract_strided_slice %15 {offsets = [56, 0], sizes = [8, 128], strides = [1, 1]} : vector<64x128xf32> to vector<8x128xf32>
    %cst_61 = arith.constant dense<0.000000e+00> : vector<8x128xf32>
    %209 = tpu.matmul %207, %16, %cst_61 {dimension_numbers = #tpu.dot_dimension_numbers<[1], [0], [0], [1], [0, 0, 1, 1], [], []>} : vector<8x32xf32>, vector<32x128xf32>, vector<8x128xf32> -> vector<8x128xf32>
    %210 = arith.addf %208, %209 : vector<8x128xf32>
    %211 = vector.broadcast %8 : vector<1x128xf32> to vector<8x128xf32>
    %212 = arith.mulf %210, %211 : vector<8x128xf32>
    %213 = math.tanh %212 : vector<8x128xf32>
    %214 = vector.extract_strided_slice %213 {offsets = [0, 0], sizes = [8, 32], strides = [1, 1]} : vector<8x128xf32> to vector<8x32xf32>
    %cst_62 = arith.constant 5.000000e-01 : f32
    %215 = vector.broadcast %cst_62 : f32 to vector<8x32xf32>
    %216 = arith.mulf %215, %214 : vector<8x32xf32>
    %cst_63 = arith.constant 5.000000e-01 : f32
    %217 = vector.broadcast %cst_63 : f32 to vector<8x32xf32>
    %218 = arith.addf %216, %217 : vector<8x32xf32>
    %219 = vector.extract_strided_slice %213 {offsets = [0, 32], sizes = [8, 32], strides = [1, 1]} : vector<8x128xf32> to vector<8x32xf32>
    %cst_64 = arith.constant 5.000000e-01 : f32
    %220 = vector.broadcast %cst_64 : f32 to vector<8x32xf32>
    %221 = arith.mulf %220, %219 : vector<8x32xf32>
    %cst_65 = arith.constant 5.000000e-01 : f32
    %222 = vector.broadcast %cst_65 : f32 to vector<8x32xf32>
    %223 = arith.addf %221, %222 : vector<8x32xf32>
    %224 = vector.extract_strided_slice %213 {offsets = [0, 64], sizes = [8, 32], strides = [1, 1]} : vector<8x128xf32> to vector<8x32xf32>
    %225 = vector.extract_strided_slice %213 {offsets = [0, 96], sizes = [8, 32], strides = [1, 1]} : vector<8x128xf32> to vector<8x32xf32>
    %cst_66 = arith.constant 5.000000e-01 : f32
    %226 = vector.broadcast %cst_66 : f32 to vector<8x32xf32>
    %227 = arith.mulf %226, %225 : vector<8x32xf32>
    %cst_67 = arith.constant 5.000000e-01 : f32
    %228 = vector.broadcast %cst_67 : f32 to vector<8x32xf32>
    %229 = arith.addf %227, %228 : vector<8x32xf32>
    %230 = arith.mulf %223, %205 : vector<8x32xf32>
    %231 = arith.mulf %218, %224 : vector<8x32xf32>
    %232 = arith.addf %230, %231 : vector<8x32xf32>
    %233 = math.tanh %232 : vector<8x32xf32>
    %234 = arith.mulf %229, %233 : vector<8x32xf32>
    %c0_68 = arith.constant 0 : index
    %c0_69 = arith.constant 0 : index
    %235 = vector.load %arg5[%c0_68, %c0_69] : memref<32x128xf32, #tpu.memory_space<vmem>>, vector<32x128xf32>
    %cst_70 = arith.constant dense<0.000000e+00> : vector<8x128xf32>
    %236 = tpu.matmul %234, %235, %cst_70 {dimension_numbers = #tpu.dot_dimension_numbers<[1], [0], [0], [1], [0, 0, 1, 1], [], []>} : vector<8x32xf32>, vector<32x128xf32>, vector<8x128xf32> -> vector<8x128xf32>
    %c0_71 = arith.constant 0 : index
    %c0_72 = arith.constant 0 : index
    %237 = vector.load %arg6[%c0_71, %c0_72] : memref<1x128xf32, #tpu.memory_space<vmem>>, vector<1x128xf32>
    %238 = vector.broadcast %237 : vector<1x128xf32> to vector<8x128xf32>
    %239 = arith.addf %236, %238 : vector<8x128xf32>
    %c0_73 = arith.constant 0 : index
    %c0_74 = arith.constant 0 : index
    %240 = vector.load %arg7[%c0_73, %c0_74] : memref<32x128xf32, #tpu.memory_space<vmem>>, vector<32x128xf32>
    %cst_75 = arith.constant dense<0.000000e+00> : vector<8x128xf32>
    %241 = tpu.matmul %234, %240, %cst_75 {dimension_numbers = #tpu.dot_dimension_numbers<[1], [0], [0], [1], [0, 0, 1, 1], [], []>} : vector<8x32xf32>, vector<32x128xf32>, vector<8x128xf32> -> vector<8x128xf32>
    %242 = arith.addf %239, %241 : vector<8x128xf32>
    %243 = vector.broadcast %8 : vector<1x128xf32> to vector<8x128xf32>
    %244 = arith.mulf %242, %243 : vector<8x128xf32>
    %245 = math.tanh %244 : vector<8x128xf32>
    %246 = vector.extract_strided_slice %245 {offsets = [0, 0], sizes = [8, 32], strides = [1, 1]} : vector<8x128xf32> to vector<8x32xf32>
    %cst_76 = arith.constant 5.000000e-01 : f32
    %247 = vector.broadcast %cst_76 : f32 to vector<8x32xf32>
    %248 = arith.mulf %247, %246 : vector<8x32xf32>
    %cst_77 = arith.constant 5.000000e-01 : f32
    %249 = vector.broadcast %cst_77 : f32 to vector<8x32xf32>
    %250 = arith.addf %248, %249 : vector<8x32xf32>
    %251 = vector.extract_strided_slice %245 {offsets = [0, 32], sizes = [8, 32], strides = [1, 1]} : vector<8x128xf32> to vector<8x32xf32>
    %cst_78 = arith.constant 5.000000e-01 : f32
    %252 = vector.broadcast %cst_78 : f32 to vector<8x32xf32>
    %253 = arith.mulf %252, %251 : vector<8x32xf32>
    %cst_79 = arith.constant 5.000000e-01 : f32
    %254 = vector.broadcast %cst_79 : f32 to vector<8x32xf32>
    %255 = arith.addf %253, %254 : vector<8x32xf32>
    %256 = vector.extract_strided_slice %245 {offsets = [0, 64], sizes = [8, 32], strides = [1, 1]} : vector<8x128xf32> to vector<8x32xf32>
    %257 = vector.extract_strided_slice %245 {offsets = [0, 96], sizes = [8, 32], strides = [1, 1]} : vector<8x128xf32> to vector<8x32xf32>
    %cst_80 = arith.constant 5.000000e-01 : f32
    %258 = vector.broadcast %cst_80 : f32 to vector<8x32xf32>
    %259 = arith.mulf %258, %257 : vector<8x32xf32>
    %cst_81 = arith.constant 5.000000e-01 : f32
    %260 = vector.broadcast %cst_81 : f32 to vector<8x32xf32>
    %261 = arith.addf %259, %260 : vector<8x32xf32>
    %262 = arith.mulf %255, %232 : vector<8x32xf32>
    %263 = arith.mulf %250, %256 : vector<8x32xf32>
    %264 = arith.addf %262, %263 : vector<8x32xf32>
    %265 = math.tanh %264 : vector<8x32xf32>
    %266 = arith.mulf %261, %265 : vector<8x32xf32>
    %cst_82 = arith.constant dense<0.000000e+00> : vector<8x128xf32>
    %267 = tpu.matmul %266, %240, %cst_82 {dimension_numbers = #tpu.dot_dimension_numbers<[1], [0], [0], [1], [0, 0, 1, 1], [], []>} : vector<8x32xf32>, vector<32x128xf32>, vector<8x128xf32> -> vector<8x128xf32>
    %268 = arith.addf %239, %267 : vector<8x128xf32>
    %269 = vector.broadcast %8 : vector<1x128xf32> to vector<8x128xf32>
    %270 = arith.mulf %268, %269 : vector<8x128xf32>
    %271 = math.tanh %270 : vector<8x128xf32>
    %272 = vector.extract_strided_slice %271 {offsets = [0, 0], sizes = [8, 32], strides = [1, 1]} : vector<8x128xf32> to vector<8x32xf32>
    %cst_83 = arith.constant 5.000000e-01 : f32
    %273 = vector.broadcast %cst_83 : f32 to vector<8x32xf32>
    %274 = arith.mulf %273, %272 : vector<8x32xf32>
    %cst_84 = arith.constant 5.000000e-01 : f32
    %275 = vector.broadcast %cst_84 : f32 to vector<8x32xf32>
    %276 = arith.addf %274, %275 : vector<8x32xf32>
    %277 = vector.extract_strided_slice %271 {offsets = [0, 32], sizes = [8, 32], strides = [1, 1]} : vector<8x128xf32> to vector<8x32xf32>
    %cst_85 = arith.constant 5.000000e-01 : f32
    %278 = vector.broadcast %cst_85 : f32 to vector<8x32xf32>
    %279 = arith.mulf %278, %277 : vector<8x32xf32>
    %cst_86 = arith.constant 5.000000e-01 : f32
    %280 = vector.broadcast %cst_86 : f32 to vector<8x32xf32>
    %281 = arith.addf %279, %280 : vector<8x32xf32>
    %282 = vector.extract_strided_slice %271 {offsets = [0, 64], sizes = [8, 32], strides = [1, 1]} : vector<8x128xf32> to vector<8x32xf32>
    %283 = vector.extract_strided_slice %271 {offsets = [0, 96], sizes = [8, 32], strides = [1, 1]} : vector<8x128xf32> to vector<8x32xf32>
    %cst_87 = arith.constant 5.000000e-01 : f32
    %284 = vector.broadcast %cst_87 : f32 to vector<8x32xf32>
    %285 = arith.mulf %284, %283 : vector<8x32xf32>
    %cst_88 = arith.constant 5.000000e-01 : f32
    %286 = vector.broadcast %cst_88 : f32 to vector<8x32xf32>
    %287 = arith.addf %285, %286 : vector<8x32xf32>
    %288 = arith.mulf %281, %264 : vector<8x32xf32>
    %289 = arith.mulf %276, %282 : vector<8x32xf32>
    %290 = arith.addf %288, %289 : vector<8x32xf32>
    %291 = math.tanh %290 : vector<8x32xf32>
    %292 = arith.mulf %287, %291 : vector<8x32xf32>
    %cst_89 = arith.constant dense<0.000000e+00> : vector<8x128xf32>
    %293 = tpu.matmul %292, %240, %cst_89 {dimension_numbers = #tpu.dot_dimension_numbers<[1], [0], [0], [1], [0, 0, 1, 1], [], []>} : vector<8x32xf32>, vector<32x128xf32>, vector<8x128xf32> -> vector<8x128xf32>
    %294 = arith.addf %239, %293 : vector<8x128xf32>
    %295 = vector.broadcast %8 : vector<1x128xf32> to vector<8x128xf32>
    %296 = arith.mulf %294, %295 : vector<8x128xf32>
    %297 = math.tanh %296 : vector<8x128xf32>
    %298 = vector.extract_strided_slice %297 {offsets = [0, 0], sizes = [8, 32], strides = [1, 1]} : vector<8x128xf32> to vector<8x32xf32>
    %cst_90 = arith.constant 5.000000e-01 : f32
    %299 = vector.broadcast %cst_90 : f32 to vector<8x32xf32>
    %300 = arith.mulf %299, %298 : vector<8x32xf32>
    %cst_91 = arith.constant 5.000000e-01 : f32
    %301 = vector.broadcast %cst_91 : f32 to vector<8x32xf32>
    %302 = arith.addf %300, %301 : vector<8x32xf32>
    %303 = vector.extract_strided_slice %297 {offsets = [0, 32], sizes = [8, 32], strides = [1, 1]} : vector<8x128xf32> to vector<8x32xf32>
    %cst_92 = arith.constant 5.000000e-01 : f32
    %304 = vector.broadcast %cst_92 : f32 to vector<8x32xf32>
    %305 = arith.mulf %304, %303 : vector<8x32xf32>
    %cst_93 = arith.constant 5.000000e-01 : f32
    %306 = vector.broadcast %cst_93 : f32 to vector<8x32xf32>
    %307 = arith.addf %305, %306 : vector<8x32xf32>
    %308 = vector.extract_strided_slice %297 {offsets = [0, 64], sizes = [8, 32], strides = [1, 1]} : vector<8x128xf32> to vector<8x32xf32>
    %309 = vector.extract_strided_slice %297 {offsets = [0, 96], sizes = [8, 32], strides = [1, 1]} : vector<8x128xf32> to vector<8x32xf32>
    %cst_94 = arith.constant 5.000000e-01 : f32
    %310 = vector.broadcast %cst_94 : f32 to vector<8x32xf32>
    %311 = arith.mulf %310, %309 : vector<8x32xf32>
    %cst_95 = arith.constant 5.000000e-01 : f32
    %312 = vector.broadcast %cst_95 : f32 to vector<8x32xf32>
    %313 = arith.addf %311, %312 : vector<8x32xf32>
    %314 = arith.mulf %307, %290 : vector<8x32xf32>
    %315 = arith.mulf %302, %308 : vector<8x32xf32>
    %316 = arith.addf %314, %315 : vector<8x32xf32>
    %317 = math.tanh %316 : vector<8x32xf32>
    %318 = arith.mulf %313, %317 : vector<8x32xf32>
    %cst_96 = arith.constant dense<0.000000e+00> : vector<8x128xf32>
    %319 = tpu.matmul %318, %240, %cst_96 {dimension_numbers = #tpu.dot_dimension_numbers<[1], [0], [0], [1], [0, 0, 1, 1], [], []>} : vector<8x32xf32>, vector<32x128xf32>, vector<8x128xf32> -> vector<8x128xf32>
    %320 = arith.addf %239, %319 : vector<8x128xf32>
    %321 = vector.broadcast %8 : vector<1x128xf32> to vector<8x128xf32>
    %322 = arith.mulf %320, %321 : vector<8x128xf32>
    %323 = math.tanh %322 : vector<8x128xf32>
    %324 = vector.extract_strided_slice %323 {offsets = [0, 0], sizes = [8, 32], strides = [1, 1]} : vector<8x128xf32> to vector<8x32xf32>
    %cst_97 = arith.constant 5.000000e-01 : f32
    %325 = vector.broadcast %cst_97 : f32 to vector<8x32xf32>
    %326 = arith.mulf %325, %324 : vector<8x32xf32>
    %cst_98 = arith.constant 5.000000e-01 : f32
    %327 = vector.broadcast %cst_98 : f32 to vector<8x32xf32>
    %328 = arith.addf %326, %327 : vector<8x32xf32>
    %329 = vector.extract_strided_slice %323 {offsets = [0, 32], sizes = [8, 32], strides = [1, 1]} : vector<8x128xf32> to vector<8x32xf32>
    %cst_99 = arith.constant 5.000000e-01 : f32
    %330 = vector.broadcast %cst_99 : f32 to vector<8x32xf32>
    %331 = arith.mulf %330, %329 : vector<8x32xf32>
    %cst_100 = arith.constant 5.000000e-01 : f32
    %332 = vector.broadcast %cst_100 : f32 to vector<8x32xf32>
    %333 = arith.addf %331, %332 : vector<8x32xf32>
    %334 = vector.extract_strided_slice %323 {offsets = [0, 64], sizes = [8, 32], strides = [1, 1]} : vector<8x128xf32> to vector<8x32xf32>
    %335 = vector.extract_strided_slice %323 {offsets = [0, 96], sizes = [8, 32], strides = [1, 1]} : vector<8x128xf32> to vector<8x32xf32>
    %cst_101 = arith.constant 5.000000e-01 : f32
    %336 = vector.broadcast %cst_101 : f32 to vector<8x32xf32>
    %337 = arith.mulf %336, %335 : vector<8x32xf32>
    %cst_102 = arith.constant 5.000000e-01 : f32
    %338 = vector.broadcast %cst_102 : f32 to vector<8x32xf32>
    %339 = arith.addf %337, %338 : vector<8x32xf32>
    %340 = arith.mulf %333, %316 : vector<8x32xf32>
    %341 = arith.mulf %328, %334 : vector<8x32xf32>
    %342 = arith.addf %340, %341 : vector<8x32xf32>
    %343 = math.tanh %342 : vector<8x32xf32>
    %344 = arith.mulf %339, %343 : vector<8x32xf32>
    %cst_103 = arith.constant dense<0.000000e+00> : vector<8x128xf32>
    %345 = tpu.matmul %344, %240, %cst_103 {dimension_numbers = #tpu.dot_dimension_numbers<[1], [0], [0], [1], [0, 0, 1, 1], [], []>} : vector<8x32xf32>, vector<32x128xf32>, vector<8x128xf32> -> vector<8x128xf32>
    %346 = arith.addf %239, %345 : vector<8x128xf32>
    %347 = vector.broadcast %8 : vector<1x128xf32> to vector<8x128xf32>
    %348 = arith.mulf %346, %347 : vector<8x128xf32>
    %349 = math.tanh %348 : vector<8x128xf32>
    %350 = vector.extract_strided_slice %349 {offsets = [0, 0], sizes = [8, 32], strides = [1, 1]} : vector<8x128xf32> to vector<8x32xf32>
    %cst_104 = arith.constant 5.000000e-01 : f32
    %351 = vector.broadcast %cst_104 : f32 to vector<8x32xf32>
    %352 = arith.mulf %351, %350 : vector<8x32xf32>
    %cst_105 = arith.constant 5.000000e-01 : f32
    %353 = vector.broadcast %cst_105 : f32 to vector<8x32xf32>
    %354 = arith.addf %352, %353 : vector<8x32xf32>
    %355 = vector.extract_strided_slice %349 {offsets = [0, 32], sizes = [8, 32], strides = [1, 1]} : vector<8x128xf32> to vector<8x32xf32>
    %cst_106 = arith.constant 5.000000e-01 : f32
    %356 = vector.broadcast %cst_106 : f32 to vector<8x32xf32>
    %357 = arith.mulf %356, %355 : vector<8x32xf32>
    %cst_107 = arith.constant 5.000000e-01 : f32
    %358 = vector.broadcast %cst_107 : f32 to vector<8x32xf32>
    %359 = arith.addf %357, %358 : vector<8x32xf32>
    %360 = vector.extract_strided_slice %349 {offsets = [0, 64], sizes = [8, 32], strides = [1, 1]} : vector<8x128xf32> to vector<8x32xf32>
    %361 = vector.extract_strided_slice %349 {offsets = [0, 96], sizes = [8, 32], strides = [1, 1]} : vector<8x128xf32> to vector<8x32xf32>
    %cst_108 = arith.constant 5.000000e-01 : f32
    %362 = vector.broadcast %cst_108 : f32 to vector<8x32xf32>
    %363 = arith.mulf %362, %361 : vector<8x32xf32>
    %cst_109 = arith.constant 5.000000e-01 : f32
    %364 = vector.broadcast %cst_109 : f32 to vector<8x32xf32>
    %365 = arith.addf %363, %364 : vector<8x32xf32>
    %366 = arith.mulf %359, %342 : vector<8x32xf32>
    %367 = arith.mulf %354, %360 : vector<8x32xf32>
    %368 = arith.addf %366, %367 : vector<8x32xf32>
    %369 = math.tanh %368 : vector<8x32xf32>
    %370 = arith.mulf %365, %369 : vector<8x32xf32>
    %cst_110 = arith.constant dense<0.000000e+00> : vector<8x128xf32>
    %371 = tpu.matmul %370, %240, %cst_110 {dimension_numbers = #tpu.dot_dimension_numbers<[1], [0], [0], [1], [0, 0, 1, 1], [], []>} : vector<8x32xf32>, vector<32x128xf32>, vector<8x128xf32> -> vector<8x128xf32>
    %372 = arith.addf %239, %371 : vector<8x128xf32>
    %373 = vector.broadcast %8 : vector<1x128xf32> to vector<8x128xf32>
    %374 = arith.mulf %372, %373 : vector<8x128xf32>
    %375 = math.tanh %374 : vector<8x128xf32>
    %376 = vector.extract_strided_slice %375 {offsets = [0, 0], sizes = [8, 32], strides = [1, 1]} : vector<8x128xf32> to vector<8x32xf32>
    %cst_111 = arith.constant 5.000000e-01 : f32
    %377 = vector.broadcast %cst_111 : f32 to vector<8x32xf32>
    %378 = arith.mulf %377, %376 : vector<8x32xf32>
    %cst_112 = arith.constant 5.000000e-01 : f32
    %379 = vector.broadcast %cst_112 : f32 to vector<8x32xf32>
    %380 = arith.addf %378, %379 : vector<8x32xf32>
    %381 = vector.extract_strided_slice %375 {offsets = [0, 32], sizes = [8, 32], strides = [1, 1]} : vector<8x128xf32> to vector<8x32xf32>
    %cst_113 = arith.constant 5.000000e-01 : f32
    %382 = vector.broadcast %cst_113 : f32 to vector<8x32xf32>
    %383 = arith.mulf %382, %381 : vector<8x32xf32>
    %cst_114 = arith.constant 5.000000e-01 : f32
    %384 = vector.broadcast %cst_114 : f32 to vector<8x32xf32>
    %385 = arith.addf %383, %384 : vector<8x32xf32>
    %386 = vector.extract_strided_slice %375 {offsets = [0, 64], sizes = [8, 32], strides = [1, 1]} : vector<8x128xf32> to vector<8x32xf32>
    %387 = vector.extract_strided_slice %375 {offsets = [0, 96], sizes = [8, 32], strides = [1, 1]} : vector<8x128xf32> to vector<8x32xf32>
    %cst_115 = arith.constant 5.000000e-01 : f32
    %388 = vector.broadcast %cst_115 : f32 to vector<8x32xf32>
    %389 = arith.mulf %388, %387 : vector<8x32xf32>
    %cst_116 = arith.constant 5.000000e-01 : f32
    %390 = vector.broadcast %cst_116 : f32 to vector<8x32xf32>
    %391 = arith.addf %389, %390 : vector<8x32xf32>
    %392 = arith.mulf %385, %368 : vector<8x32xf32>
    %393 = arith.mulf %380, %386 : vector<8x32xf32>
    %394 = arith.addf %392, %393 : vector<8x32xf32>
    %395 = math.tanh %394 : vector<8x32xf32>
    %396 = arith.mulf %391, %395 : vector<8x32xf32>
    %397 = tpu.concatenate %266, %292, %318, %344, %370, %396 in 1 : vector<8x32xf32>, vector<8x32xf32>, vector<8x32xf32>, vector<8x32xf32>, vector<8x32xf32>, vector<8x32xf32> -> vector<8x192xf32>
    %c0_117 = arith.constant 0 : index
    %c0_118 = arith.constant 0 : index
    %398 = vector.load %arg8[%c0_117, %c0_118] : memref<8x192xf32, #tpu.memory_space<vmem>>, vector<8x192xf32>
    tpu.vector_store %arg8[%c0_117, %c0_118], %397 {strides = array<i32>} : memref<8x192xf32, #tpu.memory_space<vmem>>, vector<8x192xf32>,
    return
  }
  func.func @transform_0(%arg0: i32) -> (i32, i32, i32) {
    %c0_i32 = arith.constant 0 : i32
    %c0_i32_0 = arith.constant 0 : i32
    %c0_i32_1 = arith.constant 0 : i32
    return %c0_i32, %arg0, %c0_i32_0 : i32, i32, i32
  }
  func.func @transform_1(%arg0: i32) -> (i32, i32) {
    %c0_i32 = arith.constant 0 : i32
    %c0_i32_0 = arith.constant 0 : i32
    %c0_i32_1 = arith.constant 0 : i32
    return %c0_i32, %c0_i32_0 : i32, i32
  }
  func.func @transform_2(%arg0: i32) -> (i32, i32) {
    %c0_i32 = arith.constant 0 : i32
    %c0_i32_0 = arith.constant 0 : i32
    %c0_i32_1 = arith.constant 0 : i32
    return %c0_i32, %c0_i32_0 : i32, i32
  }
  func.func @transform_3(%arg0: i32) -> (i32, i32) {
    %c0_i32 = arith.constant 0 : i32
    %c0_i32_0 = arith.constant 0 : i32
    %c0_i32_1 = arith.constant 0 : i32
    return %c0_i32, %c0_i32_0 : i32, i32
  }
  func.func @transform_4(%arg0: i32) -> (i32, i32) {
    %c0_i32 = arith.constant 0 : i32
    %c0_i32_0 = arith.constant 0 : i32
    %c0_i32_1 = arith.constant 0 : i32
    return %c0_i32, %c0_i32_0 : i32, i32
  }
  func.func @transform_5(%arg0: i32) -> (i32, i32) {
    %c0_i32 = arith.constant 0 : i32
    %c0_i32_0 = arith.constant 0 : i32
    %c0_i32_1 = arith.constant 0 : i32
    return %c0_i32, %c0_i32_0 : i32, i32
  }
  func.func @transform_6(%arg0: i32) -> (i32, i32) {
    %c0_i32 = arith.constant 0 : i32
    %c0_i32_0 = arith.constant 0 : i32
    %c0_i32_1 = arith.constant 0 : i32
    return %c0_i32, %c0_i32_0 : i32, i32
  }
  func.func @transform_7(%arg0: i32) -> (i32, i32) {
    %c0_i32 = arith.constant 0 : i32
    %c0_i32_0 = arith.constant 0 : i32
    return %arg0, %c0_i32 : i32, i32
  }
}

</mosaic_0001>

<llo_original>
// kernel: seq2seq_v2_forward.1
$region0: #{seq2seq_v2_forward.1}
  #allocation0 [shape = 'u32[]', space=smem, size = 0x4, offset = 0x4, fixed_abs, tag = 'smem constant byte address 0x4 - core index']
  #allocation1 [shape = 'u32[72,128]{1,0:T(1,128)}', space=vmem, size = 0x9000, scoped, tag = 'internal scratch']
  %s0 = inlined_call_operand.vmem [shape: f32[8,8,4], index: 0, kind: input, shape index: {}]
  %s1 = inlined_call_operand.vmem [shape: f32[4,128], index: 1, kind: input, shape index: {}]
  %s2 = inlined_call_operand.vmem [shape: f32[1,128], index: 2, kind: input, shape index: {}]
  %s3 = inlined_call_operand.vmem [shape: f32[32,128], index: 3, kind: input, shape index: {}]
  %s4 = inlined_call_operand.vmem [shape: f32[32,128], index: 4, kind: input, shape index: {}]
  %s5 = inlined_call_operand.vmem [shape: f32[1,128], index: 5, kind: input, shape index: {}]
  %s6 = inlined_call_operand.vmem [shape: f32[32,128], index: 6, kind: input, shape index: {}]
  %s7 = inlined_call_operand.vmem [shape: f32[8,192], index: 7, kind: output, shape index: {}]
  %s8 = sld [smem:[#allocation0]]
  $region38: #{seq2seq_v2_forward.1} parent=0
    _
  %s10 = ssub.s32 1, %s8
  %s11 = scalar_select 0, %s10, %s8
  // Predicated region
  $region2: #{seq2seq_v2_forward.1} parent=0 // pred_check
    _
  $region3: #{seq2seq_v2_forward.1} parent=0 // pred_check_branch
    %13 = sbr.rel (0) target = $region5
  $region4: #{seq2seq_v2_forward.1} parent=0 // pred_region
    _
  $region5: #{seq2seq_v2_forward.1} parent=0 // pred_fallthru
    _
  // Predicated region
  $region6: #{seq2seq_v2_forward.1} parent=0 // pred_check
    _
  $region7: #{seq2seq_v2_forward.1} parent=0 // pred_check_branch
    %15 = sbr.rel (0) target = $region9
  $region8: #{seq2seq_v2_forward.1} parent=0 // pred_region
    _
  $region9: #{seq2seq_v2_forward.1} parent=0 // pred_fallthru
    _
  // Predicated region
  $region10: #{seq2seq_v2_forward.1} parent=0 // pred_check
    _
  $region11: #{seq2seq_v2_forward.1} parent=0 // pred_check_branch
    %17 = sbr.rel (0) target = $region13
  $region12: #{seq2seq_v2_forward.1} parent=0 // pred_region
    _
  $region13: #{seq2seq_v2_forward.1} parent=0 // pred_fallthru
    _
  // Predicated region
  $region14: #{seq2seq_v2_forward.1} parent=0 // pred_check
    _
  $region15: #{seq2seq_v2_forward.1} parent=0 // pred_check_branch
    %19 = sbr.rel (0) target = $region17
  $region16: #{seq2seq_v2_forward.1} parent=0 // pred_region
    _
  $region17: #{seq2seq_v2_forward.1} parent=0 // pred_fallthru
    _
  // Predicated region
  $region18: #{seq2seq_v2_forward.1} parent=0 // pred_check
    _
  $region19: #{seq2seq_v2_forward.1} parent=0 // pred_check_branch
    %21 = sbr.rel (0) target = $region21
  $region20: #{seq2seq_v2_forward.1} parent=0 // pred_region
    _
  $region21: #{seq2seq_v2_forward.1} parent=0 // pred_fallthru
    _
  // Predicated region
  $region22: #{seq2seq_v2_forward.1} parent=0 // pred_check
    _
  $region23: #{seq2seq_v2_forward.1} parent=0 // pred_check_branch
    %23 = sbr.rel (0) target = $region25
  $region24: #{seq2seq_v2_forward.1} parent=0 // pred_region
    _
  $region25: #{seq2seq_v2_forward.1} parent=0 // pred_fallthru
    _
  // Predicated region
  $region26: #{seq2seq_v2_forward.1} parent=0 // pred_check
    _
  $region27: #{seq2seq_v2_forward.1} parent=0 // pred_check_branch
    %25 = sbr.rel (0) target = $region29
  $region28: #{seq2seq_v2_forward.1} parent=0 // pred_region
    _
  $region29: #{seq2seq_v2_forward.1} parent=0 // pred_fallthru
    _
  %v26 = vlaneseq
  %v27 = vand.u32 %v26, 127
  %vm28 = vcmp.ge.s32.totalorder %v27, 64
  %vm29 = vcmp.lt.s32.totalorder %v27, 96
  %vm30 = vmand %vm28, %vm29
  %v31 = vsel %vm30, 1.0, 0.5
  %v32 = vld [vmem:[%s0] sm:$0xff]
  %v33 = vld [vmem:[%s0 + $0x8] sm:$0xff]
  %v34 = vld [vmem:[%s0 + $0x10] sm:$0xff]
  %v35 = vld [vmem:[%s0 + $0x18] sm:$0xff]
  %v36 = vld [vmem:[%s0 + $0x20] sm:$0xff]
  %v37 = vld [vmem:[%s0 + $0x28] sm:$0xff]
  %v38 = vld [vmem:[%s0 + $0x30] sm:$0xff]
  %v39 = vld [vmem:[%s0 + $0x38] sm:$0xff]
  %v40 = vld [vmem:[%s1] sm:$0xf]
  %v41 = vld [vmem:[%s2] sm:$0x1]
  %v43 = vperm.slane %v41, 0
  %vm45 = vcmask 31744
  %v47 = vsel %vm45, %v32, 0
  %v50 = vsel %vm45, %v33, 0
  %v53 = vsel %vm45, %v34, 0
  %v56 = vsel %vm45, %v35, 0
  %v59 = vsel %vm45, %v36, 0
  %v62 = vsel %vm45, %v37, 0
  %v65 = vsel %vm45, %v38, 0
  %v68 = vsel %vm45, %v39, 0
  %vm70 = vcmask 1043456
  %v72 = vsel %vm70, %v40, 0
  %74 = vmatpush.msra.mxu0 0.0
  %75 = vmatpush.msra.mxu0 0.0
  %76 = vmatpush.msra.mxu0 0.0
  %77 = vmatpush.msra.mxu0 0.0
  %78 = vmatpush.msra.mxu0 0.0
  %79 = vmatpush.msra.mxu0 0.0
  %80 = vmatpush.msra.mxu0 0.0
  %81 = vmatpush.msra.mxu0 0.0
  %82 = vmatpush.msra.mxu0 0.0
  %83 = vmatpush.msra.mxu0 0.0
  %84 = vmatpush.msra.mxu0 0.0
  %85 = vmatpush.msra.mxu0 0.0
  %86 = vmatpush.msra.mxu0 0.0
  %87 = vmatpush.msra.mxu0 0.0
  %88 = vmatpush.msra.mxu0 0.0
  %89 = vmatpush.msra.mxu0 %v72
  %90 = vmatmul.f32.gmra.mxu0 %v47
  %v91 = vpop.f32.mrf.mxu0
  %v92 = vadd.f32 %v43, %v91
  %93 = vmatmul.f32.gmra.mxu0 %v50
  %v94 = vpop.f32.mrf.mxu0
  %v95 = vadd.f32 %v43, %v94
  %96 = vmatmul.f32.gmra.mxu0 %v53
  %v97 = vpop.f32.mrf.mxu0
  %v98 = vadd.f32 %v43, %v97
  %99 = vmatmul.f32.gmra.mxu0 %v56
  %v100 = vpop.f32.mrf.mxu0
  %v101 = vadd.f32 %v43, %v100
  %102 = vmatmul.f32.gmra.mxu0 %v59
  %v103 = vpop.f32.mrf.mxu0
  %v104 = vadd.f32 %v43, %v103
  %105 = vmatmul.f32.gmra.mxu0 %v62
  %v106 = vpop.f32.mrf.mxu0
  %v107 = vadd.f32 %v43, %v106
  %108 = vmatmul.f32.gmra.mxu0 %v65
  %v109 = vpop.f32.mrf.mxu0
  %v110 = vadd.f32 %v43, %v109
  %111 = vmatmul.f32.gmra.mxu0 %v68
  %v112 = vpop.f32.mrf.mxu0
  %v113 = vadd.f32 %v43, %v112
  %114 = vdwg.mxu0
  %v115 = vld [vmem:[%s3] sm:$0xff]
  %v116 = vld [vmem:[%s3 + $0x8] sm:$0xff]
  %v117 = vld [vmem:[%s3 + $0x10] sm:$0xff]
  %v118 = vld [vmem:[%s3 + $0x18] sm:$0xff]
  %vm119 = vcmask 261120
  %v121 = vsel %vm119, 0.0, 0
  %123 = vmatpush.msra.mxu0 0.0
  %124 = vmatpush.msra.mxu0 0.0
  %125 = vmatpush.msra.mxu0 0.0
  %126 = vmatpush.msra.mxu0 0.0
  %127 = vmatpush.msra.mxu0 0.0
  %128 = vmatpush.msra.mxu0 0.0
  %129 = vmatpush.msra.mxu0 0.0
  %130 = vmatpush.msra.mxu0 0.0
  %131 = vmatpush.msra.mxu0 0.0
  %132 = vmatpush.msra.mxu0 0.0
  %133 = vmatpush.msra.mxu0 0.0
  %134 = vmatpush.msra.mxu0 0.0
  %135 = vmatpush.msra.mxu0 %v118
  %136 = vmatpush.msra.mxu0 %v117
  %137 = vmatpush.msra.mxu0 %v116
  %138 = vmatpush.msra.mxu0 %v115
  %139 = vmatmul.f32.gmra.mxu0 %v121
  %v140 = vpop.f32.mrf.mxu0
  %v141 = vadd.f32 0.0, %v140
  %142 = vdwg.mxu0
  %v143 = vadd.f32 %v92, %v141
  %v144 = vmul.f32 %v143, %v31
  %v145 = vtanh.pop %v144
  %v146 = vmul.f32 %v145, 0.5
  %v147 = vadd.f32 %v146, 0.5
  %v148 = vmul.f32 %v147, 0.0
  %150 = vrot.lane.b32.xlu0 %v145, 64
  %v151 = vpop.permute.xlu0 %150
  %v153 = vmul.f32 %v147, %v151
  %155 = vrot.lane.b32.xlu0 %v153, 32
  %v156 = vpop.permute.xlu0 %155
  %v158 = vadd.f32 %v148, %v156
  %v159 = vtanh.pop %v158
  %161 = vrot.lane.b32.xlu0 %v159, 64
  %v162 = vpop.permute.xlu0 %161
  %v164 = vmul.f32 %v147, %v162
  %166 = vrot.lane.b32.xlu0 %v164, 32
  %v167 = vpop.permute.xlu0 %166
  %v168 = vsel %vm119, %v167, 0
  %170 = vmatpush.msra.mxu0 0.0
  %171 = vmatpush.msra.mxu0 0.0
  %172 = vmatpush.msra.mxu0 0.0
  %173 = vmatpush.msra.mxu0 0.0
  %174 = vmatpush.msra.mxu0 0.0
  %175 = vmatpush.msra.mxu0 0.0
  %176 = vmatpush.msra.mxu0 0.0
  %177 = vmatpush.msra.mxu0 0.0
  %178 = vmatpush.msra.mxu0 0.0
  %179 = vmatpush.msra.mxu0 0.0
  %180 = vmatpush.msra.mxu0 0.0
  %181 = vmatpush.msra.mxu0 0.0
  %182 = vmatpush.msra.mxu0 %v118
  %183 = vmatpush.msra.mxu0 %v117
  %184 = vmatpush.msra.mxu0 %v116
  %185 = vmatpush.msra.mxu0 %v115
  %186 = vmatmul.f32.gmra.mxu0 %v168
  %v187 = vpop.f32.mrf.mxu0
  %v188 = vadd.f32 0.0, %v187
  %189 = vdwg.mxu0
  %v190 = vadd.f32 %v95, %v188
  %v191 = vmul.f32 %v190, %v31
  %v192 = vtanh.pop %v191
  %v193 = vmul.f32 %v192, 0.5
  %v194 = vadd.f32 %v193, 0.5
  %v195 = vmul.f32 %v194, %v158
  %197 = vrot.lane.b32.xlu0 %v192, 64
  %v198 = vpop.permute.xlu0 %197
  %v200 = vmul.f32 %v194, %v198
  %202 = vrot.lane.b32.xlu0 %v200, 32
  %v203 = vpop.permute.xlu0 %202
  %v205 = vadd.f32 %v195, %v203
  %v206 = vtanh.pop %v205
  %208 = vrot.lane.b32.xlu0 %v206, 64
  %v209 = vpop.permute.xlu0 %208
  %v211 = vmul.f32 %v194, %v209
  %213 = vrot.lane.b32.xlu0 %v211, 32
  %v214 = vpop.permute.xlu0 %213
  %v215 = vsel %vm119, %v214, 0
  %217 = vmatpush.msra.mxu0 0.0
  %218 = vmatpush.msra.mxu0 0.0
  %219 = vmatpush.msra.mxu0 0.0
  %220 = vmatpush.msra.mxu0 0.0
  %221 = vmatpush.msra.mxu0 0.0
  %222 = vmatpush.msra.mxu0 0.0
  %223 = vmatpush.msra.mxu0 0.0
  %224 = vmatpush.msra.mxu0 0.0
  %225 = vmatpush.msra.mxu0 0.0
  %226 = vmatpush.msra.mxu0 0.0
  %227 = vmatpush.msra.mxu0 0.0
  %228 = vmatpush.msra.mxu0 0.0
  %229 = vmatpush.msra.mxu0 %v118
  %230 = vmatpush.msra.mxu0 %v117
  %231 = vmatpush.msra.mxu0 %v116
  %232 = vmatpush.msra.mxu0 %v115
  %233 = vmatmul.f32.gmra.mxu0 %v215
  %v234 = vpop.f32.mrf.mxu0
  %v235 = vadd.f32 0.0, %v234
  %236 = vdwg.mxu0
  %v237 = vadd.f32 %v98, %v235
  %v238 = vmul.f32 %v237, %v31
  %v239 = vtanh.pop %v238
  %v240 = vmul.f32 %v239, 0.5
  %v241 = vadd.f32 %v240, 0.5
  %v242 = vmul.f32 %v241, %v205
  %244 = vrot.lane.b32.xlu0 %v239, 64
  %v245 = vpop.permute.xlu0 %244
  %v247 = vmul.f32 %v241, %v245
  %249 = vrot.lane.b32.xlu0 %v247, 32
  %v250 = vpop.permute.xlu0 %249
  %v252 = vadd.f32 %v242, %v250
  %v253 = vtanh.pop %v252
  %255 = vrot.lane.b32.xlu0 %v253, 64
  %v256 = vpop.permute.xlu0 %255
  %v258 = vmul.f32 %v241, %v256
  %260 = vrot.lane.b32.xlu0 %v258, 32
  %v261 = vpop.permute.xlu0 %260
  %v262 = vsel %vm119, %v261, 0
  %264 = vmatpush.msra.mxu0 0.0
  %265 = vmatpush.msra.mxu0 0.0
  %266 = vmatpush.msra.mxu0 0.0
  %267 = vmatpush.msra.mxu0 0.0
  %268 = vmatpush.msra.mxu0 0.0
  %269 = vmatpush.msra.mxu0 0.0
  %270 = vmatpush.msra.mxu0 0.0
  %271 = vmatpush.msra.mxu0 0.0
  %272 = vmatpush.msra.mxu0 0.0
  %273 = vmatpush.msra.mxu0 0.0
  %274 = vmatpush.msra.mxu0 0.0
  %275 = vmatpush.msra.mxu0 0.0
  %276 = vmatpush.msra.mxu0 %v118
  %277 = vmatpush.msra.mxu0 %v117
  %278 = vmatpush.msra.mxu0 %v116
  %279 = vmatpush.msra.mxu0 %v115
  %280 = vmatmul.f32.gmra.mxu0 %v262
  %v281 = vpop.f32.mrf.mxu0
  %v282 = vadd.f32 0.0, %v281
  %283 = vdwg.mxu0
  %v284 = vadd.f32 %v101, %v282
  %v285 = vmul.f32 %v284, %v31
  %v286 = vtanh.pop %v285
  %v287 = vmul.f32 %v286, 0.5
  %v288 = vadd.f32 %v287, 0.5
  %v289 = vmul.f32 %v288, %v252
  %291 = vrot.lane.b32.xlu0 %v286, 64
  %v292 = vpop.permute.xlu0 %291
  %v294 = vmul.f32 %v288, %v292
  %296 = vrot.lane.b32.xlu0 %v294, 32
  %v297 = vpop.permute.xlu0 %296
  %v299 = vadd.f32 %v289, %v297
  %v300 = vtanh.pop %v299
  %302 = vrot.lane.b32.xlu0 %v300, 64
  %v303 = vpop.permute.xlu0 %302
  %v305 = vmul.f32 %v288, %v303
  %307 = vrot.lane.b32.xlu0 %v305, 32
  %v308 = vpop.permute.xlu0 %307
  %v309 = vsel %vm119, %v308, 0
  %311 = vmatpush.msra.mxu0 0.0
  %312 = vmatpush.msra.mxu0 0.0
  %313 = vmatpush.msra.mxu0 0.0
  %314 = vmatpush.msra.mxu0 0.0
  %315 = vmatpush.msra.mxu0 0.0
  %316 = vmatpush.msra.mxu0 0.0
  %317 = vmatpush.msra.mxu0 0.0
  %318 = vmatpush.msra.mxu0 0.0
  %319 = vmatpush.msra.mxu0 0.0
  %320 = vmatpush.msra.mxu0 0.0
  %321 = vmatpush.msra.mxu0 0.0
  %322 = vmatpush.msra.mxu0 0.0
  %323 = vmatpush.msra.mxu0 %v118
  %324 = vmatpush.msra.mxu0 %v117
  %325 = vmatpush.msra.mxu0 %v116
  %326 = vmatpush.msra.mxu0 %v115
  %327 = vmatmul.f32.gmra.mxu0 %v309
  %v328 = vpop.f32.mrf.mxu0
  %v329 = vadd.f32 0.0, %v328
  %330 = vdwg.mxu0
  %v331 = vadd.f32 %v104, %v329
  %v332 = vmul.f32 %v331, %v31
  %v333 = vtanh.pop %v332
  %v334 = vmul.f32 %v333, 0.5
  %v335 = vadd.f32 %v334, 0.5
  %v336 = vmul.f32 %v335, %v299
  %338 = vrot.lane.b32.xlu0 %v333, 64
  %v339 = vpop.permute.xlu0 %338
  %v341 = vmul.f32 %v335, %v339
  %343 = vrot.lane.b32.xlu0 %v341, 32
  %v344 = vpop.permute.xlu0 %343
  %v346 = vadd.f32 %v336, %v344
  %v347 = vtanh.pop %v346
  %349 = vrot.lane.b32.xlu0 %v347, 64
  %v350 = vpop.permute.xlu0 %349
  %v352 = vmul.f32 %v335, %v350
  %354 = vrot.lane.b32.xlu0 %v352, 32
  %v355 = vpop.permute.xlu0 %354
  %v356 = vsel %vm119, %v355, 0
  %358 = vmatpush.msra.mxu0 0.0
  %359 = vmatpush.msra.mxu0 0.0
  %360 = vmatpush.msra.mxu0 0.0
  %361 = vmatpush.msra.mxu0 0.0
  %362 = vmatpush.msra.mxu0 0.0
  %363 = vmatpush.msra.mxu0 0.0
  %364 = vmatpush.msra.mxu0 0.0
  %365 = vmatpush.msra.mxu0 0.0
  %366 = vmatpush.msra.mxu0 0.0
  %367 = vmatpush.msra.mxu0 0.0
  %368 = vmatpush.msra.mxu0 0.0
  %369 = vmatpush.msra.mxu0 0.0
  %370 = vmatpush.msra.mxu0 %v118
  %371 = vmatpush.msra.mxu0 %v117
  %372 = vmatpush.msra.mxu0 %v116
  %373 = vmatpush.msra.mxu0 %v115
  %374 = vmatmul.f32.gmra.mxu0 %v356
  %v375 = vpop.f32.mrf.mxu0
  %v376 = vadd.f32 0.0, %v375
  %377 = vdwg.mxu0
  %v378 = vadd.f32 %v107, %v376
  %v379 = vmul.f32 %v378, %v31
  %v380 = vtanh.pop %v379
  %v381 = vmul.f32 %v380, 0.5
  %v382 = vadd.f32 %v381, 0.5
  %v383 = vmul.f32 %v382, %v346
  %385 = vrot.lane.b32.xlu0 %v380, 64
  %v386 = vpop.permute.xlu0 %385
  %v388 = vmul.f32 %v382, %v386
  %390 = vrot.lane.b32.xlu0 %v388, 32
  %v391 = vpop.permute.xlu0 %390
  %v393 = vadd.f32 %v383, %v391
  %v394 = vtanh.pop %v393
  %396 = vrot.lane.b32.xlu0 %v394, 64
  %v397 = vpop.permute.xlu0 %396
  %v399 = vmul.f32 %v382, %v397
  %401 = vrot.lane.b32.xlu0 %v399, 32
  %v402 = vpop.permute.xlu0 %401
  %v403 = vsel %vm119, %v402, 0
  %405 = vmatpush.msra.mxu0 0.0
  %406 = vmatpush.msra.mxu0 0.0
  %407 = vmatpush.msra.mxu0 0.0
  %408 = vmatpush.msra.mxu0 0.0
  %409 = vmatpush.msra.mxu0 0.0
  %410 = vmatpush.msra.mxu0 0.0
  %411 = vmatpush.msra.mxu0 0.0
  %412 = vmatpush.msra.mxu0 0.0
  %413 = vmatpush.msra.mxu0 0.0
  %414 = vmatpush.msra.mxu0 0.0
  %415 = vmatpush.msra.mxu0 0.0
  %416 = vmatpush.msra.mxu0 0.0
  %417 = vmatpush.msra.mxu0 %v118
  %418 = vmatpush.msra.mxu0 %v117
  %419 = vmatpush.msra.mxu0 %v116
  %420 = vmatpush.msra.mxu0 %v115
  %421 = vmatmul.f32.gmra.mxu0 %v403
  %v422 = vpop.f32.mrf.mxu0
  %v423 = vadd.f32 0.0, %v422
  %424 = vdwg.mxu0
  %v425 = vadd.f32 %v110, %v423
  %v426 = vmul.f32 %v425, %v31
  %v427 = vtanh.pop %v426
  %v428 = vmul.f32 %v427, 0.5
  %v429 = vadd.f32 %v428, 0.5
  %v430 = vmul.f32 %v429, %v393
  %432 = vrot.lane.b32.xlu0 %v427, 64
  %v433 = vpop.permute.xlu0 %432
  %v435 = vmul.f32 %v429, %v433
  %437 = vrot.lane.b32.xlu0 %v435, 32
  %v438 = vpop.permute.xlu0 %437
  %v440 = vadd.f32 %v430, %v438
  %v441 = vtanh.pop %v440
  %443 = vrot.lane.b32.xlu0 %v441, 64
  %v444 = vpop.permute.xlu0 %443
  %v446 = vmul.f32 %v429, %v444
  %448 = vrot.lane.b32.xlu0 %v446, 32
  %v449 = vpop.permute.xlu0 %448
  %v450 = vsel %vm119, %v449, 0
  %452 = vmatpush.msra.mxu0 0.0
  %453 = vmatpush.msra.mxu0 0.0
  %454 = vmatpush.msra.mxu0 0.0
  %455 = vmatpush.msra.mxu0 0.0
  %456 = vmatpush.msra.mxu0 0.0
  %457 = vmatpush.msra.mxu0 0.0
  %458 = vmatpush.msra.mxu0 0.0
  %459 = vmatpush.msra.mxu0 0.0
  %460 = vmatpush.msra.mxu0 0.0
  %461 = vmatpush.msra.mxu0 0.0
  %462 = vmatpush.msra.mxu0 0.0
  %463 = vmatpush.msra.mxu0 0.0
  %464 = vmatpush.msra.mxu0 %v118
  %465 = vmatpush.msra.mxu0 %v117
  %466 = vmatpush.msra.mxu0 %v116
  %467 = vmatpush.msra.mxu0 %v115
  %468 = vmatmul.f32.gmra.mxu0 %v450
  %v469 = vpop.f32.mrf.mxu0
  %v470 = vadd.f32 0.0, %v469
  %471 = vdwg.mxu0
  %v472 = vadd.f32 %v113, %v470
  %v473 = vmul.f32 %v472, %v31
  %v474 = vtanh.pop %v473
  %v475 = vmul.f32 %v474, 0.5
  %v476 = vadd.f32 %v475, 0.5
  %v477 = vmul.f32 %v476, %v440
  %479 = vrot.lane.b32.xlu0 %v474, 64
  %v480 = vpop.permute.xlu0 %479
  %v482 = vmul.f32 %v476, %v480
  %484 = vrot.lane.b32.xlu0 %v482, 32
  %v485 = vpop.permute.xlu0 %484
  %v487 = vadd.f32 %v477, %v485
  %v488 = vtanh.pop %v487
  %490 = vrot.lane.b32.xlu0 %v488, 64
  %v491 = vpop.permute.xlu0 %490
  %v493 = vmul.f32 %v476, %v491
  %v494 = vld [vmem:[%s4] sm:$0xff]
  %v495 = vld [vmem:[%s4 + $0x8] sm:$0xff]
  %v496 = vld [vmem:[%s4 + $0x10] sm:$0xff]
  %v497 = vld [vmem:[%s4 + $0x18] sm:$0xff]
  %v498 = vld [vmem:[%s5] sm:$0x1]
  %v500 = vperm.slane %v498, 0
  %503 = vrot.lane.b32.xlu0 %v493, 32
  %v504 = vpop.permute.xlu0 %503
  %v505 = vsel %vm119, %v504, 0
  %507 = vmatpush.msra.mxu0 0.0
  %508 = vmatpush.msra.mxu0 0.0
  %509 = vmatpush.msra.mxu0 0.0
  %510 = vmatpush.msra.mxu0 0.0
  %511 = vmatpush.msra.mxu0 0.0
  %512 = vmatpush.msra.mxu0 0.0
  %513 = vmatpush.msra.mxu0 0.0
  %514 = vmatpush.msra.mxu0 0.0
  %515 = vmatpush.msra.mxu0 0.0
  %516 = vmatpush.msra.mxu0 0.0
  %517 = vmatpush.msra.mxu0 0.0
  %518 = vmatpush.msra.mxu0 0.0
  %519 = vmatpush.msra.mxu0 %v497
  %520 = vmatpush.msra.mxu0 %v496
  %521 = vmatpush.msra.mxu0 %v495
  %522 = vmatpush.msra.mxu0 %v494
  %523 = vmatmul.f32.gmra.mxu0 %v505
  %v524 = vpop.f32.mrf.mxu0
  %v525 = vadd.f32 %v500, %v524
  %526 = vdwg.mxu0
  %v527 = vld [vmem:[%s6] sm:$0xff]
  %v528 = vld [vmem:[%s6 + $0x8] sm:$0xff]
  %v529 = vld [vmem:[%s6 + $0x10] sm:$0xff]
  %v530 = vld [vmem:[%s6 + $0x18] sm:$0xff]
  %531 = vmatpush.msra.mxu0 0.0
  %532 = vmatpush.msra.mxu0 0.0
  %533 = vmatpush.msra.mxu0 0.0
  %534 = vmatpush.msra.mxu0 0.0
  %535 = vmatpush.msra.mxu0 0.0
  %536 = vmatpush.msra.mxu0 0.0
  %537 = vmatpush.msra.mxu0 0.0
  %538 = vmatpush.msra.mxu0 0.0
  %539 = vmatpush.msra.mxu0 0.0
  %540 = vmatpush.msra.mxu0 0.0
  %541 = vmatpush.msra.mxu0 0.0
  %542 = vmatpush.msra.mxu0 0.0
  %543 = vmatpush.msra.mxu0 %v530
  %544 = vmatpush.msra.mxu0 %v529
  %545 = vmatpush.msra.mxu0 %v528
  %546 = vmatpush.msra.mxu0 %v527
  %547 = vmatmul.f32.gmra.mxu0 %v505
  %v548 = vpop.f32.mrf.mxu0
  %v549 = vadd.f32 0.0, %v548
  %550 = vdwg.mxu0
  %v551 = vadd.f32 %v525, %v549
  %v552 = vmul.f32 %v551, %v31
  %v553 = vtanh.pop %v552
  %v554 = vmul.f32 %v553, 0.5
  %v555 = vadd.f32 %v554, 0.5
  %v556 = vmul.f32 %v555, %v487
  %558 = vrot.lane.b32.xlu0 %v553, 64
  %v559 = vpop.permute.xlu0 %558
  %v561 = vmul.f32 %v555, %v559
  %563 = vrot.lane.b32.xlu0 %v561, 32
  %v564 = vpop.permute.xlu0 %563
  %v566 = vadd.f32 %v556, %v564
  %v567 = vtanh.pop %v566
  %569 = vrot.lane.b32.xlu0 %v567, 64
  %v570 = vpop.permute.xlu0 %569
  %v572 = vmul.f32 %v555, %v570
  %574 = vrot.lane.b32.xlu0 %v572, 32
  %v575 = vpop.permute.xlu0 %574
  %v576 = vsel %vm119, %v575, 0
  %578 = vmatpush.msra.mxu0 0.0
  %579 = vmatpush.msra.mxu0 0.0
  %580 = vmatpush.msra.mxu0 0.0
  %581 = vmatpush.msra.mxu0 0.0
  %582 = vmatpush.msra.mxu0 0.0
  %583 = vmatpush.msra.mxu0 0.0
  %584 = vmatpush.msra.mxu0 0.0
  %585 = vmatpush.msra.mxu0 0.0
  %586 = vmatpush.msra.mxu0 0.0
  %587 = vmatpush.msra.mxu0 0.0
  %588 = vmatpush.msra.mxu0 0.0
  %589 = vmatpush.msra.mxu0 0.0
  %590 = vmatpush.msra.mxu0 %v530
  %591 = vmatpush.msra.mxu0 %v529
  %592 = vmatpush.msra.mxu0 %v528
  %593 = vmatpush.msra.mxu0 %v527
  %594 = vmatmul.f32.gmra.mxu0 %v576
  %v595 = vpop.f32.mrf.mxu0
  %v596 = vadd.f32 0.0, %v595
  %597 = vdwg.mxu0
  %v598 = vadd.f32 %v525, %v596
  %v599 = vmul.f32 %v598, %v31
  %v600 = vtanh.pop %v599
  %v601 = vmul.f32 %v600, 0.5
  %v602 = vadd.f32 %v601, 0.5
  %v603 = vmul.f32 %v602, %v566
  %605 = vrot.lane.b32.xlu0 %v600, 64
  %v606 = vpop.permute.xlu0 %605
  %v608 = vmul.f32 %v602, %v606
  %610 = vrot.lane.b32.xlu0 %v608, 32
  %v611 = vpop.permute.xlu0 %610
  %v613 = vadd.f32 %v603, %v611
  %v614 = vtanh.pop %v613
  %616 = vrot.lane.b32.xlu0 %v614, 64
  %v617 = vpop.permute.xlu0 %616
  %v619 = vmul.f32 %v602, %v617
  %621 = vrot.lane.b32.xlu0 %v619, 32
  %v622 = vpop.permute.xlu0 %621
  %v623 = vsel %vm119, %v622, 0
  %625 = vmatpush.msra.mxu0 0.0
  %626 = vmatpush.msra.mxu0 0.0
  %627 = vmatpush.msra.mxu0 0.0
  %628 = vmatpush.msra.mxu0 0.0
  %629 = vmatpush.msra.mxu0 0.0
  %630 = vmatpush.msra.mxu0 0.0
  %631 = vmatpush.msra.mxu0 0.0
  %632 = vmatpush.msra.mxu0 0.0
  %633 = vmatpush.msra.mxu0 0.0
  %634 = vmatpush.msra.mxu0 0.0
  %635 = vmatpush.msra.mxu0 0.0
  %636 = vmatpush.msra.mxu0 0.0
  %637 = vmatpush.msra.mxu0 %v530
  %638 = vmatpush.msra.mxu0 %v529
  %639 = vmatpush.msra.mxu0 %v528
  %640 = vmatpush.msra.mxu0 %v527
  %641 = vmatmul.f32.gmra.mxu0 %v623
  %v642 = vpop.f32.mrf.mxu0
  %v643 = vadd.f32 0.0, %v642
  %644 = vdwg.mxu0
  %v645 = vadd.f32 %v525, %v643
  %v646 = vmul.f32 %v645, %v31
  %v647 = vtanh.pop %v646
  %v648 = vmul.f32 %v647, 0.5
  %v649 = vadd.f32 %v648, 0.5
  %v650 = vmul.f32 %v649, %v613
  %652 = vrot.lane.b32.xlu0 %v647, 64
  %v653 = vpop.permute.xlu0 %652
  %v655 = vmul.f32 %v649, %v653
  %657 = vrot.lane.b32.xlu0 %v655, 32
  %v658 = vpop.permute.xlu0 %657
  %v660 = vadd.f32 %v650, %v658
  %v661 = vtanh.pop %v660
  %663 = vrot.lane.b32.xlu0 %v661, 64
  %v664 = vpop.permute.xlu0 %663
  %v666 = vmul.f32 %v649, %v664
  %668 = vrot.lane.b32.xlu0 %v666, 32
  %v669 = vpop.permute.xlu0 %668
  %v670 = vsel %vm119, %v669, 0
  %672 = vmatpush.msra.mxu0 0.0
  %673 = vmatpush.msra.mxu0 0.0
  %674 = vmatpush.msra.mxu0 0.0
  %675 = vmatpush.msra.mxu0 0.0
  %676 = vmatpush.msra.mxu0 0.0
  %677 = vmatpush.msra.mxu0 0.0
  %678 = vmatpush.msra.mxu0 0.0
  %679 = vmatpush.msra.mxu0 0.0
  %680 = vmatpush.msra.mxu0 0.0
  %681 = vmatpush.msra.mxu0 0.0
  %682 = vmatpush.msra.mxu0 0.0
  %683 = vmatpush.msra.mxu0 0.0
  %684 = vmatpush.msra.mxu0 %v530
  %685 = vmatpush.msra.mxu0 %v529
  %686 = vmatpush.msra.mxu0 %v528
  %687 = vmatpush.msra.mxu0 %v527
  %688 = vmatmul.f32.gmra.mxu0 %v670
  %v689 = vpop.f32.mrf.mxu0
  %v690 = vadd.f32 0.0, %v689
  %691 = vdwg.mxu0
  %v692 = vadd.f32 %v525, %v690
  %v693 = vmul.f32 %v692, %v31
  %v694 = vtanh.pop %v693
  %v695 = vmul.f32 %v694, 0.5
  %v696 = vadd.f32 %v695, 0.5
  %v697 = vmul.f32 %v696, %v660
  %699 = vrot.lane.b32.xlu0 %v694, 64
  %v700 = vpop.permute.xlu0 %699
  %v702 = vmul.f32 %v696, %v700
  %704 = vrot.lane.b32.xlu0 %v702, 32
  %v705 = vpop.permute.xlu0 %704
  %v707 = vadd.f32 %v697, %v705
  %v708 = vtanh.pop %v707
  %710 = vrot.lane.b32.xlu0 %v708, 64
  %v711 = vpop.permute.xlu0 %710
  %v713 = vmul.f32 %v696, %v711
  %715 = vrot.lane.b32.xlu0 %v713, 32
  %v716 = vpop.permute.xlu0 %715
  %v717 = vsel %vm119, %v716, 0
  %719 = vmatpush.msra.mxu0 0.0
  %720 = vmatpush.msra.mxu0 0.0
  %721 = vmatpush.msra.mxu0 0.0
  %722 = vmatpush.msra.mxu0 0.0
  %723 = vmatpush.msra.mxu0 0.0
  %724 = vmatpush.msra.mxu0 0.0
  %725 = vmatpush.msra.mxu0 0.0
  %726 = vmatpush.msra.mxu0 0.0
  %727 = vmatpush.msra.mxu0 0.0
  %728 = vmatpush.msra.mxu0 0.0
  %729 = vmatpush.msra.mxu0 0.0
  %730 = vmatpush.msra.mxu0 0.0
  %731 = vmatpush.msra.mxu0 %v530
  %732 = vmatpush.msra.mxu0 %v529
  %733 = vmatpush.msra.mxu0 %v528
  %734 = vmatpush.msra.mxu0 %v527
  %735 = vmatmul.f32.gmra.mxu0 %v717
  %v736 = vpop.f32.mrf.mxu0
  %v737 = vadd.f32 0.0, %v736
  %738 = vdwg.mxu0
  %v739 = vadd.f32 %v525, %v737
  %v740 = vmul.f32 %v739, %v31
  %v741 = vtanh.pop %v740
  %v742 = vmul.f32 %v741, 0.5
  %v743 = vadd.f32 %v742, 0.5
  %v744 = vmul.f32 %v743, %v707
  %746 = vrot.lane.b32.xlu0 %v741, 64
  %v747 = vpop.permute.xlu0 %746
  %v749 = vmul.f32 %v743, %v747
  %751 = vrot.lane.b32.xlu0 %v749, 32
  %v752 = vpop.permute.xlu0 %751
  %v754 = vadd.f32 %v744, %v752
  %v755 = vtanh.pop %v754
  %757 = vrot.lane.b32.xlu0 %v755, 64
  %v758 = vpop.permute.xlu0 %757
  %v760 = vmul.f32 %v743, %v758
  %762 = vrot.lane.b32.xlu0 %v760, 32
  %v763 = vpop.permute.xlu0 %762
  %v764 = vsel %vm119, %v763, 0
  %766 = vmatpush.msra.mxu0 0.0
  %767 = vmatpush.msra.mxu0 0.0
  %768 = vmatpush.msra.mxu0 0.0
  %769 = vmatpush.msra.mxu0 0.0
  %770 = vmatpush.msra.mxu0 0.0
  %771 = vmatpush.msra.mxu0 0.0
  %772 = vmatpush.msra.mxu0 0.0
  %773 = vmatpush.msra.mxu0 0.0
  %774 = vmatpush.msra.mxu0 0.0
  %775 = vmatpush.msra.mxu0 0.0
  %776 = vmatpush.msra.mxu0 0.0
  %777 = vmatpush.msra.mxu0 0.0
  %778 = vmatpush.msra.mxu0 %v530
  %779 = vmatpush.msra.mxu0 %v529
  %780 = vmatpush.msra.mxu0 %v528
  %781 = vmatpush.msra.mxu0 %v527
  %782 = vmatmul.f32.gmra.mxu0 %v764
  %v783 = vpop.f32.mrf.mxu0
  %v784 = vadd.f32 0.0, %v783
  %785 = vdwg.mxu0
  %v786 = vadd.f32 %v525, %v784
  %v787 = vmul.f32 %v786, %v31
  %v788 = vtanh.pop %v787
  %v789 = vmul.f32 %v788, 0.5
  %v790 = vadd.f32 %v789, 0.5
  %v791 = vmul.f32 %v790, %v754
  %793 = vrot.lane.b32.xlu0 %v788, 64
  %v794 = vpop.permute.xlu0 %793
  %v796 = vmul.f32 %v790, %v794
  %798 = vrot.lane.b32.xlu0 %v796, 32
  %v799 = vpop.permute.xlu0 %798
  %v801 = vadd.f32 %v791, %v799
  %v802 = vtanh.pop %v801
  %804 = vrot.lane.b32.xlu0 %v802, 64
  %v805 = vpop.permute.xlu0 %804
  %v807 = vmul.f32 %v790, %v805
  %809 = vrot.lane.b32.xlu0 %v619, 64
  %v810 = vpop.permute.xlu0 %809
  %812 = vrot.lane.b32.xlu0 %v666, 96
  %v813 = vpop.permute.xlu0 %812
  %817 = vrot.lane.b32.xlu0 %v807, 64
  %v818 = vpop.permute.xlu0 %817
  %v820 = vsel %vm119, %v575, %v810
  %vm821 = vcmask 523264
  %v822 = vsel %vm821, %v820, %v813
  %vm823 = vcmask 785408
  %v824 = vsel %vm823, %v822, %v713
  %v825 = vsel %vm119, %v763, %v818
  %826 = vst [vmem:[%s7] sm:$0xff] %v824
  %827 = vst.msk [vmem:[%s7 + $0x8] sm:$0xff] %vm821, %v825
  // Predicated region
  $region30: #{seq2seq_v2_forward.1} parent=0 // pred_check
    _
  $region31: #{seq2seq_v2_forward.1} parent=0 // pred_check_branch
    %829 = sbr.rel (0) target = $region33
  $region32: #{seq2seq_v2_forward.1} parent=0 // pred_region
    _
  $region33: #{seq2seq_v2_forward.1} parent=0 // pred_fallthru
    _
  // Predicated region
  $region34: #{seq2seq_v2_forward.1} parent=0 // pred_check
    _
  $region35: #{seq2seq_v2_forward.1} parent=0 // pred_check_branch
    %831 = sbr.rel (0) target = $region37
  $region36: #{seq2seq_v2_forward.1} parent=0 // pred_region
    _
  $region37: #{seq2seq_v2_forward.1} parent=0 // pred_fallthru
    _

</llo_original>
